<compile_context>
chip_gen: v6e
topology: v6e:2x2x1
jax: 0.10.0
libtpu: 0.0.40
codegen_flags: <defaults>
</compile_context>

<pallas_src>
import math
import functools

import jax
import jax.numpy as jnp
from jax import lax
from jax.experimental import pallas as pl
from jax.experimental.pallas import tpu as pltpu


# ----------------------------- fused Pallas kernel --------------------------


def _lsa_fused_kernel(scale_ref, x_ref, wq_ref, wk_ref, wv_ref, wout_ref,
                      bout_ref, o_ref, attn_scratch, *,
                      batch, seq, heads, dim_head):
    """Single invocation (no grid).

    scale_ref    : SMEM (1, 1) f32      temperature.exp()
    x_ref        : [B*N, D]   bf16      all tokens, batch folded into rows
    wq/wk/wv_ref : [D, inner] bf16      effective (spectral-normed) weights^T
    wout_ref     : [inner, D] bf16      effective output-proj weight^T
    bout_ref     : [1, D]     f32       output-proj bias
    o_ref        : [B*N, D]   f32       output tokens
    attn_scratch : [B*N, inner] f32     per-head attention results (VMEM)
    """
    inner = heads * dim_head
    scale = scale_ref[0, 0]

    xb = x_ref[...]                                                 # [BN, D] bf16

    # Batched projections over ALL rows at once (MXU, f32 accumulate).
    q_all = jnp.dot(xb, wq_ref[...], preferred_element_type=jnp.float32)  # [BN, inner]
    k_all = jnp.dot(xb, wk_ref[...], preferred_element_type=jnp.float32)
    v_all = jnp.dot(xb, wv_ref[...], preferred_element_type=jnp.float32)

    # Diagonal mask, shared across batches and heads.
    row = lax.broadcasted_iota(jnp.int32, (seq, seq), 0)
    col = lax.broadcasted_iota(jnp.int32, (seq, seq), 1)
    diag = row == col
    neg_big = jnp.float32(-1e30)   # exp(neg_big - rowmax) == 0 exactly

    # contract last dim of q with last dim of k: 'qd,kd->qk' (no k transpose)
    contract_qk = (((1,), (1,)), ((), ()))

    for b in range(batch):                 # static unroll, batch is tiny
        r0 = b * seq
        for h in range(heads):             # static unroll, heads is small
            c0 = h * dim_head
            q = q_all[r0:r0 + seq, c0:c0 + dim_head]                # [N, Dh] f32
            k = k_all[r0:r0 + seq, c0:c0 + dim_head]
            v = v_all[r0:r0 + seq, c0:c0 + dim_head]

            dots = lax.dot_general(
                q.astype(jnp.bfloat16), k.astype(jnp.bfloat16), contract_qk,
                preferred_element_type=jnp.float32) * scale         # [N, N] f32
            dots = jnp.where(diag, neg_big, dots)

            # softmax over last axis (kept in f32; exp + reciprocal ride EUP)
            dots = dots - jnp.max(dots, axis=-1, keepdims=True)
            ex = jnp.exp(dots)
            inv_den = pl.reciprocal(jnp.sum(ex, axis=-1, keepdims=True),
                                    approx=True)
            attn = ex * inv_den

            head_out = jnp.dot(attn.astype(jnp.bfloat16), v.astype(jnp.bfloat16),
                               preferred_element_type=jnp.float32)  # [N, Dh]
            attn_scratch[r0:r0 + seq, c0:c0 + dim_head] = head_out

    # Output projection (bias=True) over ALL rows at once.
    out = jnp.dot(attn_scratch[...].astype(jnp.bfloat16), wout_ref[...],
                  preferred_element_type=jnp.float32) + bout_ref[...]
    o_ref[...] = out.astype(o_ref.dtype)


def lsa_forward(x, prepared, heads, dim_head):
    """x: [B, N, D] f32  -> [B, N, D] f32, using precomputed effective weights."""
    B, N, D = x.shape
    BN = B * N
    inner = heads * dim_head
    x2d = x.reshape(BN, D).astype(jnp.bfloat16)     # bf16 at the call boundary

    kern = functools.partial(_lsa_fused_kernel, batch=B, seq=N,
                             heads=heads, dim_head=dim_head)
    out2d = pl.pallas_call(
        kern,
        out_shape=jax.ShapeDtypeStruct((BN, D), jnp.float32),
        in_specs=[
            pl.BlockSpec(memory_space=pltpu.MemorySpace.SMEM),   # scale (1,1)
            pl.BlockSpec(memory_space=pltpu.MemorySpace.VMEM),   # x2d
            pl.BlockSpec(memory_space=pltpu.MemorySpace.VMEM),   # w_q_t
            pl.BlockSpec(memory_space=pltpu.MemorySpace.VMEM),   # w_k_t
            pl.BlockSpec(memory_space=pltpu.MemorySpace.VMEM),   # w_v_t
            pl.BlockSpec(memory_space=pltpu.MemorySpace.VMEM),   # w_out_t
            pl.BlockSpec(memory_space=pltpu.MemorySpace.VMEM),   # b_out
        ],
        out_specs=pl.BlockSpec(memory_space=pltpu.MemorySpace.VMEM),
        scratch_shapes=[pltpu.VMEM((BN, inner), jnp.float32)],
    )(prepared['scale'], x2d, prepared['w_q_t'], prepared['w_k_t'],
      prepared['w_v_t'], prepared['w_out_t'], prepared['b_out'])

    return out2d.reshape(B, N, D).astype(x.dtype)


# --------------------------- plain-JAX glue / params ------------------------


def sn_effective_weight(w):
    """Reproduce SNLinear.get_weight() (eval mode, stats_only=False).

    w: [out_features, in_features]
    - buffer u  = top right singular vector (vh[0]) from init-time SVD
    - sigma prm = top singular value s[0]
    - forward   : one power-iteration step -> sigma_pi; return (w/sigma_pi)*sigma_prm
    """
    _, s, vh = jnp.linalg.svd(w, full_matrices=False)
    u = vh[0]
    sigma_param = s[0]
    eps = 1e-12  # F.normalize default eps
    v = w @ u
    v = v / jnp.maximum(jnp.linalg.norm(v), eps)
    u2 = w.T @ v
    u2 = u2 / jnp.maximum(jnp.linalg.norm(u2), eps)
    sigma_pi = jnp.einsum('c,cd,d->', v, w, u2)
    return (w / sigma_pi) * sigma_param


def init_lsa_params(key, dim, heads, dim_head):
    inner = heads * dim_head
    k1, k2, k3 = jax.random.split(key, 3)
    std = 0.02  # init_multiplier = 1.0
    w_qkv = jax.random.truncated_normal(k1, -2.0, 2.0, (inner * 3, dim), jnp.float32) * std
    w_out = jax.random.truncated_normal(k2, -2.0, 2.0, (dim, inner), jnp.float32) * std
    bound = 1.0 / math.sqrt(inner)  # nn.Linear default bias init
    b_out = jax.random.uniform(k3, (dim,), jnp.float32, -bound, bound)
    temperature = math.log(dim_head ** (-0.5))  # nn.Parameter(log(dim_head^-0.5))
    return dict(w_qkv=w_qkv, w_out=w_out, b_out=b_out, temperature=temperature)


def prepare_lsa_weights(params, heads, dim_head):
    """Compute (and cache) spectral-normed effective weights ONCE.

    The SVD + power-iteration reparameterization is a one-time cost; the
    per-token forward only touches the prepared tensors below.  Weights are
    stored bf16 (MXU-native); bias and scale stay f32.
    """
    inner = heads * dim_head
    w_qkv_eff = sn_effective_weight(params['w_qkv'])    # [3*inner, D]
    w_out_eff = sn_effective_weight(params['w_out'])    # [D, inner]
    dim = params['b_out'].shape[0]
    w_qkv_t = w_qkv_eff.T                               # [D, 3*inner]
    return dict(
        w_q_t=w_qkv_t[:, 0 * inner:1 * inner].astype(jnp.bfloat16),  # [D, inner]
        w_k_t=w_qkv_t[:, 1 * inner:2 * inner].astype(jnp.bfloat16),
        w_v_t=w_qkv_t[:, 2 * inner:3 * inner].astype(jnp.bfloat16),
        w_out_t=w_out_eff.T.astype(jnp.bfloat16),                    # [inner, D]
        b_out=params['b_out'].reshape(1, dim).astype(jnp.float32),   # [1, D]
        # learned temperature -> runtime (1,1) scalar; no recompile on change
        scale=jnp.exp(jnp.asarray(params['temperature'], jnp.float32)).reshape(1, 1),
    )


def lsa_reference(x, params, heads, dim_head):
    """Plain-JAX f32 reference of the PyTorch LSA forward (option='baseline')."""
    B, N, D = x.shape
    inner = heads * dim_head
    w_qkv_eff = sn_effective_weight(params['w_qkv'])
    w_out_eff = sn_effective_weight(params['w_out'])
    scale = jnp.exp(jnp.asarray(params['temperature'], jnp.float32))
    qkv = jnp.einsum('bnd,od->bno', x, w_qkv_eff)
    q, k, v = jnp.split(qkv, 3, axis=-1)
    sh = lambda t: t.reshape(B, N, heads, dim_head).transpose(0, 2, 1, 3)
    q, k, v = sh(q), sh(k), sh(v)
    dots = jnp.einsum('bhqd,bhkd->bhqk', q, k) * scale
    mask = jnp.eye(N, dtype=bool)
    dots = jnp.where(mask, -jnp.finfo(jnp.float32).max, dots)
    attn = jax.nn.softmax(dots, axis=-1)
    out = jnp.einsum('bhqk,bhkd->bhqd', attn, v)
    out = out.transpose(0, 2, 1, 3).reshape(B, N, inner)
    # TODO(synk): nn.Dropout(p=0.0) is a no-op at inference; not implemented.
    return jnp.einsum('bni,di->bnd', out, w_out_eff) + params['b_out']


if __name__ == "__main__":
    key = jax.random.PRNGKey(0)
    kx, kp = jax.random.split(key)

    B, N, D, H, Dh = 2, 16, 32, 4, 16   # dim=32, heads=4, dim_head=16
    x = jax.random.normal(kx, (B, N, D), jnp.float32)
    params = init_lsa_params(kp, D, H, Dh)
    prepared = prepare_lsa_weights(params, H, Dh)   # spectral-norm weights cached

    out = lsa_forward(x, prepared, H, Dh)
    jax.block_until_ready(out)

    assert out.shape == (B, N, D)
    assert bool(jnp.all(jnp.isfinite(out)))

    ref = lsa_reference(x, params, H, Dh)
    max_err = float(jnp.max(jnp.abs(out - ref)))
    assert max_err < 1e-2, f"max abs diff vs reference too large: {max_err}"

    print("KERNEL_OK")
</pallas_src>

<mosaic_0001>
module attributes {stable_mosaic.version = 11 : i64} {
  func.func @_lsa_fused_kernel(%arg0: memref<1x1xf32, #tpu.memory_space<smem>>, %arg1: memref<32x32xbf16, #tpu.memory_space<vmem>>, %arg2: memref<32x64xbf16, #tpu.memory_space<vmem>>, %arg3: memref<32x64xbf16, #tpu.memory_space<vmem>>, %arg4: memref<32x64xbf16, #tpu.memory_space<vmem>>, %arg5: memref<64x32xbf16, #tpu.memory_space<vmem>>, %arg6: memref<1x32xf32, #tpu.memory_space<vmem>>, %arg7: memref<32x32xf32, #tpu.memory_space<vmem>>, %arg8: memref<32x64xf32, #tpu.memory_space<vmem>>) attributes {dimension_semantics = [], scalar_prefetch = 0 : i64, scratch_operands = 1 : i64, tpu.core_type = #tpu.core_type<tc>} {
    %c0 = arith.constant 0 : index
    %c0_0 = arith.constant 0 : index
    %0 = memref.load %arg0[%c0, %c0_0] : memref<1x1xf32, #tpu.memory_space<smem>>
    %c0_1 = arith.constant 0 : index
    %c0_2 = arith.constant 0 : index
    %1 = vector.load %arg1[%c0_1, %c0_2] : memref<32x32xbf16, #tpu.memory_space<vmem>>, vector<32x32xbf16>
    %c0_3 = arith.constant 0 : index
    %c0_4 = arith.constant 0 : index
    %2 = vector.load %arg2[%c0_3, %c0_4] : memref<32x64xbf16, #tpu.memory_space<vmem>>, vector<32x64xbf16>
    %cst = arith.constant dense<0.000000e+00> : vector<32x64xf32>
    %3 = tpu.matmul %1, %2, %cst {dimension_numbers = #tpu.dot_dimension_numbers<[1], [0], [0], [1], [0, 0, 1, 1], [], []>} : vector<32x32xbf16>, vector<32x64xbf16>, vector<32x64xf32> -> vector<32x64xf32>
    %c0_5 = arith.constant 0 : index
    %c0_6 = arith.constant 0 : index
    %4 = vector.load %arg3[%c0_5, %c0_6] : memref<32x64xbf16, #tpu.memory_space<vmem>>, vector<32x64xbf16>
    %cst_7 = arith.constant dense<0.000000e+00> : vector<32x64xf32>
    %5 = tpu.matmul %1, %4, %cst_7 {dimension_numbers = #tpu.dot_dimension_numbers<[1], [0], [0], [1], [0, 0, 1, 1], [], []>} : vector<32x32xbf16>, vector<32x64xbf16>, vector<32x64xf32> -> vector<32x64xf32>
    %c0_8 = arith.constant 0 : index
    %c0_9 = arith.constant 0 : index
    %6 = vector.load %arg4[%c0_8, %c0_9] : memref<32x64xbf16, #tpu.memory_space<vmem>>, vector<32x64xbf16>
    %cst_10 = arith.constant dense<0.000000e+00> : vector<32x64xf32>
    %7 = tpu.matmul %1, %6, %cst_10 {dimension_numbers = #tpu.dot_dimension_numbers<[1], [0], [0], [1], [0, 0, 1, 1], [], []>} : vector<32x32xbf16>, vector<32x64xbf16>, vector<32x64xf32> -> vector<32x64xf32>
    %8 = tpu.iota {dimensions = array<i32: 0>} : vector<16x16xi32>
    %9 = tpu.iota {dimensions = array<i32: 1>} : vector<16x16xi32>
    %10 = arith.cmpi eq, %8, %9 : vector<16x16xi32>
    %11 = vector.extract_strided_slice %3 {offsets = [0, 0], sizes = [16, 16], strides = [1, 1]} : vector<32x64xf32> to vector<16x16xf32>
    %12 = vector.extract_strided_slice %5 {offsets = [0, 0], sizes = [16, 16], strides = [1, 1]} : vector<32x64xf32> to vector<16x16xf32>
    %13 = vector.extract_strided_slice %7 {offsets = [0, 0], sizes = [16, 16], strides = [1, 1]} : vector<32x64xf32> to vector<16x16xf32>
    %14 = arith.truncf %11 : vector<16x16xf32> to vector<16x16xbf16>
    %15 = arith.truncf %12 : vector<16x16xf32> to vector<16x16xbf16>
    %cst_11 = arith.constant dense<0.000000e+00> : vector<16x16xf32>
    %16 = tpu.matmul %14, %15, %cst_11 {dimension_numbers = #tpu.dot_dimension_numbers<[1], [1], [0], [0], [0, 0, 1, 0], [], []>} : vector<16x16xbf16>, vector<16x16xbf16>, vector<16x16xf32> -> vector<16x16xf32>
    %17 = vector.broadcast %0 : f32 to vector<16x16xf32>
    %18 = arith.mulf %16, %17 : vector<16x16xf32>
    %cst_12 = arith.constant -1.000000e+30 : f32
    %19 = vector.broadcast %cst_12 : f32 to vector<16x16xf32>
    %20 = arith.select %10, %19, %18 : vector<16x16xi1>, vector<16x16xf32>
    %cst_13 = arith.constant dense<0xFF800000> : vector<16xf32>
    %21 = vector.multi_reduction <maximumf>, %20, %cst_13 [1] : vector<16x16xf32> to vector<16xf32>
    %22 = vector.shape_cast %21 : vector<16xf32> to vector<16x1xf32>
    %23 = vector.broadcast %22 : vector<16x1xf32> to vector<16x16xf32>
    %24 = arith.subf %20, %23 : vector<16x16xf32>
    %25 = math.exp %24 : vector<16x16xf32>
    %cst_14 = arith.constant dense<0.000000e+00> : vector<16xf32>
    %26 = vector.multi_reduction <add>, %25, %cst_14 [1] : vector<16x16xf32> to vector<16xf32>
    %27 = vector.shape_cast %26 : vector<16xf32> to vector<16x1xf32>
    %28 = tpu.reciprocal %27 {approx = true} : vector<16x1xf32> -> vector<16x1xf32>
    %29 = vector.broadcast %28 : vector<16x1xf32> to vector<16x16xf32>
    %30 = arith.mulf %25, %29 : vector<16x16xf32>
    %31 = arith.truncf %30 : vector<16x16xf32> to vector<16x16xbf16>
    %32 = arith.truncf %13 : vector<16x16xf32> to vector<16x16xbf16>
    %cst_15 = arith.constant dense<0.000000e+00> : vector<16x16xf32>
    %33 = tpu.matmul %31, %32, %cst_15 {dimension_numbers = #tpu.dot_dimension_numbers<[1], [0], [0], [1], [0, 0, 1, 1], [], []>} : vector<16x16xbf16>, vector<16x16xbf16>, vector<16x16xf32> -> vector<16x16xf32>
    %c0_16 = arith.constant 0 : index
    %c0_17 = arith.constant 0 : index
    %34 = vector.load %arg8[%c0_16, %c0_17] : memref<32x64xf32, #tpu.memory_space<vmem>>, vector<16x16xf32>
    tpu.vector_store %arg8[%c0_16, %c0_17], %33 {strides = array<i32>} : memref<32x64xf32, #tpu.memory_space<vmem>>, vector<16x16xf32>,
    %35 = vector.extract_strided_slice %3 {offsets = [0, 16], sizes = [16, 16], strides = [1, 1]} : vector<32x64xf32> to vector<16x16xf32>
    %36 = vector.extract_strided_slice %5 {offsets = [0, 16], sizes = [16, 16], strides = [1, 1]} : vector<32x64xf32> to vector<16x16xf32>
    %37 = vector.extract_strided_slice %7 {offsets = [0, 16], sizes = [16, 16], strides = [1, 1]} : vector<32x64xf32> to vector<16x16xf32>
    %38 = arith.truncf %35 : vector<16x16xf32> to vector<16x16xbf16>
    %39 = arith.truncf %36 : vector<16x16xf32> to vector<16x16xbf16>
    %cst_18 = arith.constant dense<0.000000e+00> : vector<16x16xf32>
    %40 = tpu.matmul %38, %39, %cst_18 {dimension_numbers = #tpu.dot_dimension_numbers<[1], [1], [0], [0], [0, 0, 1, 0], [], []>} : vector<16x16xbf16>, vector<16x16xbf16>, vector<16x16xf32> -> vector<16x16xf32>
    %41 = vector.broadcast %0 : f32 to vector<16x16xf32>
    %42 = arith.mulf %40, %41 : vector<16x16xf32>
    %cst_19 = arith.constant -1.000000e+30 : f32
    %43 = vector.broadcast %cst_19 : f32 to vector<16x16xf32>
    %44 = arith.select %10, %43, %42 : vector<16x16xi1>, vector<16x16xf32>
    %cst_20 = arith.constant dense<0xFF800000> : vector<16xf32>
    %45 = vector.multi_reduction <maximumf>, %44, %cst_20 [1] : vector<16x16xf32> to vector<16xf32>
    %46 = vector.shape_cast %45 : vector<16xf32> to vector<16x1xf32>
    %47 = vector.broadcast %46 : vector<16x1xf32> to vector<16x16xf32>
    %48 = arith.subf %44, %47 : vector<16x16xf32>
    %49 = math.exp %48 : vector<16x16xf32>
    %cst_21 = arith.constant dense<0.000000e+00> : vector<16xf32>
    %50 = vector.multi_reduction <add>, %49, %cst_21 [1] : vector<16x16xf32> to vector<16xf32>
    %51 = vector.shape_cast %50 : vector<16xf32> to vector<16x1xf32>
    %52 = tpu.reciprocal %51 {approx = true} : vector<16x1xf32> -> vector<16x1xf32>
    %53 = vector.broadcast %52 : vector<16x1xf32> to vector<16x16xf32>
    %54 = arith.mulf %49, %53 : vector<16x16xf32>
    %55 = arith.truncf %54 : vector<16x16xf32> to vector<16x16xbf16>
    %56 = arith.truncf %37 : vector<16x16xf32> to vector<16x16xbf16>
    %cst_22 = arith.constant dense<0.000000e+00> : vector<16x16xf32>
    %57 = tpu.matmul %55, %56, %cst_22 {dimension_numbers = #tpu.dot_dimension_numbers<[1], [0], [0], [1], [0, 0, 1, 1], [], []>} : vector<16x16xbf16>, vector<16x16xbf16>, vector<16x16xf32> -> vector<16x16xf32>
    %c0_23 = arith.constant 0 : index
    %c16 = arith.constant 16 : index
    %58 = vector.load %arg8[%c0_23, %c16] : memref<32x64xf32, #tpu.memory_space<vmem>>, vector<16x16xf32>
    tpu.vector_store %arg8[%c0_23, %c16], %57 {strides = array<i32>} : memref<32x64xf32, #tpu.memory_space<vmem>>, vector<16x16xf32>,
    %59 = vector.extract_strided_slice %3 {offsets = [0, 32], sizes = [16, 16], strides = [1, 1]} : vector<32x64xf32> to vector<16x16xf32>
    %60 = vector.extract_strided_slice %5 {offsets = [0, 32], sizes = [16, 16], strides = [1, 1]} : vector<32x64xf32> to vector<16x16xf32>
    %61 = vector.extract_strided_slice %7 {offsets = [0, 32], sizes = [16, 16], strides = [1, 1]} : vector<32x64xf32> to vector<16x16xf32>
    %62 = arith.truncf %59 : vector<16x16xf32> to vector<16x16xbf16>
    %63 = arith.truncf %60 : vector<16x16xf32> to vector<16x16xbf16>
    %cst_24 = arith.constant dense<0.000000e+00> : vector<16x16xf32>
    %64 = tpu.matmul %62, %63, %cst_24 {dimension_numbers = #tpu.dot_dimension_numbers<[1], [1], [0], [0], [0, 0, 1, 0], [], []>} : vector<16x16xbf16>, vector<16x16xbf16>, vector<16x16xf32> -> vector<16x16xf32>
    %65 = vector.broadcast %0 : f32 to vector<16x16xf32>
    %66 = arith.mulf %64, %65 : vector<16x16xf32>
    %cst_25 = arith.constant -1.000000e+30 : f32
    %67 = vector.broadcast %cst_25 : f32 to vector<16x16xf32>
    %68 = arith.select %10, %67, %66 : vector<16x16xi1>, vector<16x16xf32>
    %cst_26 = arith.constant dense<0xFF800000> : vector<16xf32>
    %69 = vector.multi_reduction <maximumf>, %68, %cst_26 [1] : vector<16x16xf32> to vector<16xf32>
    %70 = vector.shape_cast %69 : vector<16xf32> to vector<16x1xf32>
    %71 = vector.broadcast %70 : vector<16x1xf32> to vector<16x16xf32>
    %72 = arith.subf %68, %71 : vector<16x16xf32>
    %73 = math.exp %72 : vector<16x16xf32>
    %cst_27 = arith.constant dense<0.000000e+00> : vector<16xf32>
    %74 = vector.multi_reduction <add>, %73, %cst_27 [1] : vector<16x16xf32> to vector<16xf32>
    %75 = vector.shape_cast %74 : vector<16xf32> to vector<16x1xf32>
    %76 = tpu.reciprocal %75 {approx = true} : vector<16x1xf32> -> vector<16x1xf32>
    %77 = vector.broadcast %76 : vector<16x1xf32> to vector<16x16xf32>
    %78 = arith.mulf %73, %77 : vector<16x16xf32>
    %79 = arith.truncf %78 : vector<16x16xf32> to vector<16x16xbf16>
    %80 = arith.truncf %61 : vector<16x16xf32> to vector<16x16xbf16>
    %cst_28 = arith.constant dense<0.000000e+00> : vector<16x16xf32>
    %81 = tpu.matmul %79, %80, %cst_28 {dimension_numbers = #tpu.dot_dimension_numbers<[1], [0], [0], [1], [0, 0, 1, 1], [], []>} : vector<16x16xbf16>, vector<16x16xbf16>, vector<16x16xf32> -> vector<16x16xf32>
    %c0_29 = arith.constant 0 : index
    %c32 = arith.constant 32 : index
    %82 = vector.load %arg8[%c0_29, %c32] : memref<32x64xf32, #tpu.memory_space<vmem>>, vector<16x16xf32>
    tpu.vector_store %arg8[%c0_29, %c32], %81 {strides = array<i32>} : memref<32x64xf32, #tpu.memory_space<vmem>>, vector<16x16xf32>,
    %83 = vector.extract_strided_slice %3 {offsets = [0, 48], sizes = [16, 16], strides = [1, 1]} : vector<32x64xf32> to vector<16x16xf32>
    %84 = vector.extract_strided_slice %5 {offsets = [0, 48], sizes = [16, 16], strides = [1, 1]} : vector<32x64xf32> to vector<16x16xf32>
    %85 = vector.extract_strided_slice %7 {offsets = [0, 48], sizes = [16, 16], strides = [1, 1]} : vector<32x64xf32> to vector<16x16xf32>
    %86 = arith.truncf %83 : vector<16x16xf32> to vector<16x16xbf16>
    %87 = arith.truncf %84 : vector<16x16xf32> to vector<16x16xbf16>
    %cst_30 = arith.constant dense<0.000000e+00> : vector<16x16xf32>
    %88 = tpu.matmul %86, %87, %cst_30 {dimension_numbers = #tpu.dot_dimension_numbers<[1], [1], [0], [0], [0, 0, 1, 0], [], []>} : vector<16x16xbf16>, vector<16x16xbf16>, vector<16x16xf32> -> vector<16x16xf32>
    %89 = vector.broadcast %0 : f32 to vector<16x16xf32>
    %90 = arith.mulf %88, %89 : vector<16x16xf32>
    %cst_31 = arith.constant -1.000000e+30 : f32
    %91 = vector.broadcast %cst_31 : f32 to vector<16x16xf32>
    %92 = arith.select %10, %91, %90 : vector<16x16xi1>, vector<16x16xf32>
    %cst_32 = arith.constant dense<0xFF800000> : vector<16xf32>
    %93 = vector.multi_reduction <maximumf>, %92, %cst_32 [1] : vector<16x16xf32> to vector<16xf32>
    %94 = vector.shape_cast %93 : vector<16xf32> to vector<16x1xf32>
    %95 = vector.broadcast %94 : vector<16x1xf32> to vector<16x16xf32>
    %96 = arith.subf %92, %95 : vector<16x16xf32>
    %97 = math.exp %96 : vector<16x16xf32>
    %cst_33 = arith.constant dense<0.000000e+00> : vector<16xf32>
    %98 = vector.multi_reduction <add>, %97, %cst_33 [1] : vector<16x16xf32> to vector<16xf32>
    %99 = vector.shape_cast %98 : vector<16xf32> to vector<16x1xf32>
    %100 = tpu.reciprocal %99 {approx = true} : vector<16x1xf32> -> vector<16x1xf32>
    %101 = vector.broadcast %100 : vector<16x1xf32> to vector<16x16xf32>
    %102 = arith.mulf %97, %101 : vector<16x16xf32>
    %103 = arith.truncf %102 : vector<16x16xf32> to vector<16x16xbf16>
    %104 = arith.truncf %85 : vector<16x16xf32> to vector<16x16xbf16>
    %cst_34 = arith.constant dense<0.000000e+00> : vector<16x16xf32>
    %105 = tpu.matmul %103, %104, %cst_34 {dimension_numbers = #tpu.dot_dimension_numbers<[1], [0], [0], [1], [0, 0, 1, 1], [], []>} : vector<16x16xbf16>, vector<16x16xbf16>, vector<16x16xf32> -> vector<16x16xf32>
    %c0_35 = arith.constant 0 : index
    %c48 = arith.constant 48 : index
    %106 = vector.load %arg8[%c0_35, %c48] : memref<32x64xf32, #tpu.memory_space<vmem>>, vector<16x16xf32>
    tpu.vector_store %arg8[%c0_35, %c48], %105 {strides = array<i32>} : memref<32x64xf32, #tpu.memory_space<vmem>>, vector<16x16xf32>,
    %107 = vector.extract_strided_slice %3 {offsets = [16, 0], sizes = [16, 16], strides = [1, 1]} : vector<32x64xf32> to vector<16x16xf32>
    %108 = vector.extract_strided_slice %5 {offsets = [16, 0], sizes = [16, 16], strides = [1, 1]} : vector<32x64xf32> to vector<16x16xf32>
    %109 = vector.extract_strided_slice %7 {offsets = [16, 0], sizes = [16, 16], strides = [1, 1]} : vector<32x64xf32> to vector<16x16xf32>
    %110 = arith.truncf %107 : vector<16x16xf32> to vector<16x16xbf16>
    %111 = arith.truncf %108 : vector<16x16xf32> to vector<16x16xbf16>
    %cst_36 = arith.constant dense<0.000000e+00> : vector<16x16xf32>
    %112 = tpu.matmul %110, %111, %cst_36 {dimension_numbers = #tpu.dot_dimension_numbers<[1], [1], [0], [0], [0, 0, 1, 0], [], []>} : vector<16x16xbf16>, vector<16x16xbf16>, vector<16x16xf32> -> vector<16x16xf32>
    %113 = vector.broadcast %0 : f32 to vector<16x16xf32>
    %114 = arith.mulf %112, %113 : vector<16x16xf32>
    %cst_37 = arith.constant -1.000000e+30 : f32
    %115 = vector.broadcast %cst_37 : f32 to vector<16x16xf32>
    %116 = arith.select %10, %115, %114 : vector<16x16xi1>, vector<16x16xf32>
    %cst_38 = arith.constant dense<0xFF800000> : vector<16xf32>
    %117 = vector.multi_reduction <maximumf>, %116, %cst_38 [1] : vector<16x16xf32> to vector<16xf32>
    %118 = vector.shape_cast %117 : vector<16xf32> to vector<16x1xf32>
    %119 = vector.broadcast %118 : vector<16x1xf32> to vector<16x16xf32>
    %120 = arith.subf %116, %119 : vector<16x16xf32>
    %121 = math.exp %120 : vector<16x16xf32>
    %cst_39 = arith.constant dense<0.000000e+00> : vector<16xf32>
    %122 = vector.multi_reduction <add>, %121, %cst_39 [1] : vector<16x16xf32> to vector<16xf32>
    %123 = vector.shape_cast %122 : vector<16xf32> to vector<16x1xf32>
    %124 = tpu.reciprocal %123 {approx = true} : vector<16x1xf32> -> vector<16x1xf32>
    %125 = vector.broadcast %124 : vector<16x1xf32> to vector<16x16xf32>
    %126 = arith.mulf %121, %125 : vector<16x16xf32>
    %127 = arith.truncf %126 : vector<16x16xf32> to vector<16x16xbf16>
    %128 = arith.truncf %109 : vector<16x16xf32> to vector<16x16xbf16>
    %cst_40 = arith.constant dense<0.000000e+00> : vector<16x16xf32>
    %129 = tpu.matmul %127, %128, %cst_40 {dimension_numbers = #tpu.dot_dimension_numbers<[1], [0], [0], [1], [0, 0, 1, 1], [], []>} : vector<16x16xbf16>, vector<16x16xbf16>, vector<16x16xf32> -> vector<16x16xf32>
    %c16_41 = arith.constant 16 : index
    %c0_42 = arith.constant 0 : index
    %130 = vector.load %arg8[%c16_41, %c0_42] : memref<32x64xf32, #tpu.memory_space<vmem>>, vector<16x16xf32>
    tpu.vector_store %arg8[%c16_41, %c0_42], %129 {strides = array<i32>} : memref<32x64xf32, #tpu.memory_space<vmem>>, vector<16x16xf32>,
    %131 = vector.extract_strided_slice %3 {offsets = [16, 16], sizes = [16, 16], strides = [1, 1]} : vector<32x64xf32> to vector<16x16xf32>
    %132 = vector.extract_strided_slice %5 {offsets = [16, 16], sizes = [16, 16], strides = [1, 1]} : vector<32x64xf32> to vector<16x16xf32>
    %133 = vector.extract_strided_slice %7 {offsets = [16, 16], sizes = [16, 16], strides = [1, 1]} : vector<32x64xf32> to vector<16x16xf32>
    %134 = arith.truncf %131 : vector<16x16xf32> to vector<16x16xbf16>
    %135 = arith.truncf %132 : vector<16x16xf32> to vector<16x16xbf16>
    %cst_43 = arith.constant dense<0.000000e+00> : vector<16x16xf32>
    %136 = tpu.matmul %134, %135, %cst_43 {dimension_numbers = #tpu.dot_dimension_numbers<[1], [1], [0], [0], [0, 0, 1, 0], [], []>} : vector<16x16xbf16>, vector<16x16xbf16>, vector<16x16xf32> -> vector<16x16xf32>
    %137 = vector.broadcast %0 : f32 to vector<16x16xf32>
    %138 = arith.mulf %136, %137 : vector<16x16xf32>
    %cst_44 = arith.constant -1.000000e+30 : f32
    %139 = vector.broadcast %cst_44 : f32 to vector<16x16xf32>
    %140 = arith.select %10, %139, %138 : vector<16x16xi1>, vector<16x16xf32>
    %cst_45 = arith.constant dense<0xFF800000> : vector<16xf32>
    %141 = vector.multi_reduction <maximumf>, %140, %cst_45 [1] : vector<16x16xf32> to vector<16xf32>
    %142 = vector.shape_cast %141 : vector<16xf32> to vector<16x1xf32>
    %143 = vector.broadcast %142 : vector<16x1xf32> to vector<16x16xf32>
    %144 = arith.subf %140, %143 : vector<16x16xf32>
    %145 = math.exp %144 : vector<16x16xf32>
    %cst_46 = arith.constant dense<0.000000e+00> : vector<16xf32>
    %146 = vector.multi_reduction <add>, %145, %cst_46 [1] : vector<16x16xf32> to vector<16xf32>
    %147 = vector.shape_cast %146 : vector<16xf32> to vector<16x1xf32>
    %148 = tpu.reciprocal %147 {approx = true} : vector<16x1xf32> -> vector<16x1xf32>
    %149 = vector.broadcast %148 : vector<16x1xf32> to vector<16x16xf32>
    %150 = arith.mulf %145, %149 : vector<16x16xf32>
    %151 = arith.truncf %150 : vector<16x16xf32> to vector<16x16xbf16>
    %152 = arith.truncf %133 : vector<16x16xf32> to vector<16x16xbf16>
    %cst_47 = arith.constant dense<0.000000e+00> : vector<16x16xf32>
    %153 = tpu.matmul %151, %152, %cst_47 {dimension_numbers = #tpu.dot_dimension_numbers<[1], [0], [0], [1], [0, 0, 1, 1], [], []>} : vector<16x16xbf16>, vector<16x16xbf16>, vector<16x16xf32> -> vector<16x16xf32>
    %c16_48 = arith.constant 16 : index
    %c16_49 = arith.constant 16 : index
    %154 = vector.load %arg8[%c16_48, %c16_49] : memref<32x64xf32, #tpu.memory_space<vmem>>, vector<16x16xf32>
    tpu.vector_store %arg8[%c16_48, %c16_49], %153 {strides = array<i32>} : memref<32x64xf32, #tpu.memory_space<vmem>>, vector<16x16xf32>,
    %155 = vector.extract_strided_slice %3 {offsets = [16, 32], sizes = [16, 16], strides = [1, 1]} : vector<32x64xf32> to vector<16x16xf32>
    %156 = vector.extract_strided_slice %5 {offsets = [16, 32], sizes = [16, 16], strides = [1, 1]} : vector<32x64xf32> to vector<16x16xf32>
    %157 = vector.extract_strided_slice %7 {offsets = [16, 32], sizes = [16, 16], strides = [1, 1]} : vector<32x64xf32> to vector<16x16xf32>
    %158 = arith.truncf %155 : vector<16x16xf32> to vector<16x16xbf16>
    %159 = arith.truncf %156 : vector<16x16xf32> to vector<16x16xbf16>
    %cst_50 = arith.constant dense<0.000000e+00> : vector<16x16xf32>
    %160 = tpu.matmul %158, %159, %cst_50 {dimension_numbers = #tpu.dot_dimension_numbers<[1], [1], [0], [0], [0, 0, 1, 0], [], []>} : vector<16x16xbf16>, vector<16x16xbf16>, vector<16x16xf32> -> vector<16x16xf32>
    %161 = vector.broadcast %0 : f32 to vector<16x16xf32>
    %162 = arith.mulf %160, %161 : vector<16x16xf32>
    %cst_51 = arith.constant -1.000000e+30 : f32
    %163 = vector.broadcast %cst_51 : f32 to vector<16x16xf32>
    %164 = arith.select %10, %163, %162 : vector<16x16xi1>, vector<16x16xf32>
    %cst_52 = arith.constant dense<0xFF800000> : vector<16xf32>
    %165 = vector.multi_reduction <maximumf>, %164, %cst_52 [1] : vector<16x16xf32> to vector<16xf32>
    %166 = vector.shape_cast %165 : vector<16xf32> to vector<16x1xf32>
    %167 = vector.broadcast %166 : vector<16x1xf32> to vector<16x16xf32>
    %168 = arith.subf %164, %167 : vector<16x16xf32>
    %169 = math.exp %168 : vector<16x16xf32>
    %cst_53 = arith.constant dense<0.000000e+00> : vector<16xf32>
    %170 = vector.multi_reduction <add>, %169, %cst_53 [1] : vector<16x16xf32> to vector<16xf32>
    %171 = vector.shape_cast %170 : vector<16xf32> to vector<16x1xf32>
    %172 = tpu.reciprocal %171 {approx = true} : vector<16x1xf32> -> vector<16x1xf32>
    %173 = vector.broadcast %172 : vector<16x1xf32> to vector<16x16xf32>
    %174 = arith.mulf %169, %173 : vector<16x16xf32>
    %175 = arith.truncf %174 : vector<16x16xf32> to vector<16x16xbf16>
    %176 = arith.truncf %157 : vector<16x16xf32> to vector<16x16xbf16>
    %cst_54 = arith.constant dense<0.000000e+00> : vector<16x16xf32>
    %177 = tpu.matmul %175, %176, %cst_54 {dimension_numbers = #tpu.dot_dimension_numbers<[1], [0], [0], [1], [0, 0, 1, 1], [], []>} : vector<16x16xbf16>, vector<16x16xbf16>, vector<16x16xf32> -> vector<16x16xf32>
    %c16_55 = arith.constant 16 : index
    %c32_56 = arith.constant 32 : index
    %178 = vector.load %arg8[%c16_55, %c32_56] : memref<32x64xf32, #tpu.memory_space<vmem>>, vector<16x16xf32>
    tpu.vector_store %arg8[%c16_55, %c32_56], %177 {strides = array<i32>} : memref<32x64xf32, #tpu.memory_space<vmem>>, vector<16x16xf32>,
    %179 = vector.extract_strided_slice %3 {offsets = [16, 48], sizes = [16, 16], strides = [1, 1]} : vector<32x64xf32> to vector<16x16xf32>
    %180 = vector.extract_strided_slice %5 {offsets = [16, 48], sizes = [16, 16], strides = [1, 1]} : vector<32x64xf32> to vector<16x16xf32>
    %181 = vector.extract_strided_slice %7 {offsets = [16, 48], sizes = [16, 16], strides = [1, 1]} : vector<32x64xf32> to vector<16x16xf32>
    %182 = arith.truncf %179 : vector<16x16xf32> to vector<16x16xbf16>
    %183 = arith.truncf %180 : vector<16x16xf32> to vector<16x16xbf16>
    %cst_57 = arith.constant dense<0.000000e+00> : vector<16x16xf32>
    %184 = tpu.matmul %182, %183, %cst_57 {dimension_numbers = #tpu.dot_dimension_numbers<[1], [1], [0], [0], [0, 0, 1, 0], [], []>} : vector<16x16xbf16>, vector<16x16xbf16>, vector<16x16xf32> -> vector<16x16xf32>
    %185 = vector.broadcast %0 : f32 to vector<16x16xf32>
    %186 = arith.mulf %184, %185 : vector<16x16xf32>
    %cst_58 = arith.constant -1.000000e+30 : f32
    %187 = vector.broadcast %cst_58 : f32 to vector<16x16xf32>
    %188 = arith.select %10, %187, %186 : vector<16x16xi1>, vector<16x16xf32>
    %cst_59 = arith.constant dense<0xFF800000> : vector<16xf32>
    %189 = vector.multi_reduction <maximumf>, %188, %cst_59 [1] : vector<16x16xf32> to vector<16xf32>
    %190 = vector.shape_cast %189 : vector<16xf32> to vector<16x1xf32>
    %191 = vector.broadcast %190 : vector<16x1xf32> to vector<16x16xf32>
    %192 = arith.subf %188, %191 : vector<16x16xf32>
    %193 = math.exp %192 : vector<16x16xf32>
    %cst_60 = arith.constant dense<0.000000e+00> : vector<16xf32>
    %194 = vector.multi_reduction <add>, %193, %cst_60 [1] : vector<16x16xf32> to vector<16xf32>
    %195 = vector.shape_cast %194 : vector<16xf32> to vector<16x1xf32>
    %196 = tpu.reciprocal %195 {approx = true} : vector<16x1xf32> -> vector<16x1xf32>
    %197 = vector.broadcast %196 : vector<16x1xf32> to vector<16x16xf32>
    %198 = arith.mulf %193, %197 : vector<16x16xf32>
    %199 = arith.truncf %198 : vector<16x16xf32> to vector<16x16xbf16>
    %200 = arith.truncf %181 : vector<16x16xf32> to vector<16x16xbf16>
    %cst_61 = arith.constant dense<0.000000e+00> : vector<16x16xf32>
    %201 = tpu.matmul %199, %200, %cst_61 {dimension_numbers = #tpu.dot_dimension_numbers<[1], [0], [0], [1], [0, 0, 1, 1], [], []>} : vector<16x16xbf16>, vector<16x16xbf16>, vector<16x16xf32> -> vector<16x16xf32>
    %c16_62 = arith.constant 16 : index
    %c48_63 = arith.constant 48 : index
    %202 = vector.load %arg8[%c16_62, %c48_63] : memref<32x64xf32, #tpu.memory_space<vmem>>, vector<16x16xf32>
    tpu.vector_store %arg8[%c16_62, %c48_63], %201 {strides = array<i32>} : memref<32x64xf32, #tpu.memory_space<vmem>>, vector<16x16xf32>,
    %c0_64 = arith.constant 0 : index
    %c0_65 = arith.constant 0 : index
    %203 = vector.load %arg8[%c0_64, %c0_65] : memref<32x64xf32, #tpu.memory_space<vmem>>, vector<32x64xf32>
    %204 = arith.truncf %203 : vector<32x64xf32> to vector<32x64xbf16>
    %c0_66 = arith.constant 0 : index
    %c0_67 = arith.constant 0 : index
    %205 = vector.load %arg5[%c0_66, %c0_67] : memref<64x32xbf16, #tpu.memory_space<vmem>>, vector<64x32xbf16>
    %cst_68 = arith.constant dense<0.000000e+00> : vector<32x32xf32>
    %206 = tpu.matmul %204, %205, %cst_68 {dimension_numbers = #tpu.dot_dimension_numbers<[1], [0], [0], [1], [0, 0, 1, 1], [], []>} : vector<32x64xbf16>, vector<64x32xbf16>, vector<32x32xf32> -> vector<32x32xf32>
    %c0_69 = arith.constant 0 : index
    %c0_70 = arith.constant 0 : index
    %207 = vector.load %arg6[%c0_69, %c0_70] : memref<1x32xf32, #tpu.memory_space<vmem>>, vector<1x32xf32>
    %208 = vector.broadcast %207 : vector<1x32xf32> to vector<32x32xf32>
    %209 = arith.addf %206, %208 : vector<32x32xf32>
    %c0_71 = arith.constant 0 : index
    %c0_72 = arith.constant 0 : index
    %210 = vector.load %arg7[%c0_71, %c0_72] : memref<32x32xf32, #tpu.memory_space<vmem>>, vector<32x32xf32>
    tpu.vector_store %arg7[%c0_71, %c0_72], %209 {strides = array<i32>} : memref<32x32xf32, #tpu.memory_space<vmem>>, vector<32x32xf32>,
    return
  }
}

</mosaic_0001>

<llo_original>
// kernel: tpu_custom_call.1
$region0: #{tpu_custom_call.1}
  #allocation0 [shape = 'u32[]', space=smem, size = 0x4, offset = 0x4, fixed_abs, tag = 'smem constant byte address 0x4 - core index']
  #allocation1 [shape = 'u32[144,128]{1,0:T(1,128)}', space=vmem, size = 0x12000, scoped, tag = 'internal scratch']
  #allocation2 [shape = 'f32[32,64]{1,0:T(8,128)}', space=vmem, size = 0x4000, scoped, tag = 'scratch operand']
  #allocation3 [shape = 'f32[1,1]{1,0:T(1,128)S(6)}', space=smem, size = 0x200, scoped, tag = 'scoped memory for tpu_custom_call.1']
  %s0 = inlined_call_operand.<no memory space> [shape: f32[1,1], index: 0, kind: input, shape index: {}]
  %s1 = inlined_call_operand.vmem [shape: bf16[32,32], index: 1, kind: input, shape index: {}]
  %s2 = inlined_call_operand.vmem [shape: bf16[32,64], index: 2, kind: input, shape index: {}]
  %s3 = inlined_call_operand.vmem [shape: bf16[32,64], index: 3, kind: input, shape index: {}]
  %s4 = inlined_call_operand.hbm [shape: bf16[32,64], index: 4, kind: input, shape index: {}]
  %s5 = inlined_call_operand.vmem [shape: bf16[64,32], index: 5, kind: input, shape index: {}]
  %s6 = inlined_call_operand.vmem [shape: f32[1,32], index: 6, kind: input, shape index: {}]
  %s7 = inlined_call_operand.hbm [shape: f32[32,32], index: 7, kind: output, shape index: {}]
  %s8 = sld [smem:[#allocation0]]
  $region42: #{tpu_custom_call.1} parent=0
    _
  %s10 = ssub.s32 1, %s8
  %s11 = scalar_select 0, %s10, %s8
  %12 = sst [smem:[#allocation3]] %s0
  $region1: #{tpu_custom_call.1} parent=0
    #allocation4 [shape = 'u8[8192]{0}', space=vmem, size = 0x2000, scoped, tag = 'input window, operand 4, single buffered']
    #allocation5 [shape = 's32[1]{0}', space=sflag, size = 0x4, scoped, tag = 'scoped memory for tpu_custom_call.1']
    #allocation6 [shape = 's32[1]{0}', space=sflag, size = 0x4, scoped, tag = 'scoped memory for tpu_custom_call.1']
    #allocation7 [shape = 'u8[16384]{0}', space=vmem, size = 0x4000, scoped, tag = 'output window, operand 0, single buffered']
    %13 = vsyncpa [#allocation5], 0
    %14 = vsyncpa [#allocation6], 0
    // Predicated region
    $region2: #{tpu_custom_call.1} parent=1 // pred_check
      _
    $region3: #{tpu_custom_call.1} parent=1 // pred_check_branch
      %16 = sbr.rel (0) target = $region5
    $region4: #{tpu_custom_call.1} parent=1 // pred_region
      _
    $region5: #{tpu_custom_call.1} parent=1 // pred_fallthru
      _
    // Predicated region
    $region6: #{tpu_custom_call.1} parent=1 // pred_check
      _
    $region7: #{tpu_custom_call.1} parent=1 // pred_check_branch
      %18 = sbr.rel (0) target = $region9
    $region8: #{tpu_custom_call.1} parent=1 // pred_region
      _
    $region9: #{tpu_custom_call.1} parent=1 // pred_fallthru
      _
    // Predicated region
    $region10: #{tpu_custom_call.1} parent=1 // pred_check
      _
    $region11: #{tpu_custom_call.1} parent=1 // pred_check_branch
      %20 = sbr.rel (0) target = $region13
    $region12: #{tpu_custom_call.1} parent=1 // pred_region
      _
    $region13: #{tpu_custom_call.1} parent=1 // pred_fallthru
      _
    // Predicated region
    $region14: #{tpu_custom_call.1} parent=1 // pred_check
      _
    $region15: #{tpu_custom_call.1} parent=1 // pred_check_branch
      %22 = sbr.rel (0) target = $region17
    $region16: #{tpu_custom_call.1} parent=1 // pred_region
      _
    $region17: #{tpu_custom_call.1} parent=1 // pred_fallthru
      _
    // Predicated region
    $region18: #{tpu_custom_call.1} parent=1 // pred_check
      _
    $region19: #{tpu_custom_call.1} parent=1 // pred_check_branch
      %24 = sbr.rel (0) target = $region21
    $region20: #{tpu_custom_call.1} parent=1 // pred_region
      %s26 = ssub.s32 256, 256
      %27 = vsyncadd [#allocation5], %s26
      %s28 = sshll.u32 [#allocation4], 4
      %s29 = int_to_ptr.vmem [resolvable:$true] %s28
      %34 = dma.hbm_to_vmem [thread:$0]  %s4, 256, %s29, [#allocation5], 64, 64, 4
    $region21: #{tpu_custom_call.1} parent=1 // pred_fallthru
      _
    // Predicated region
    $region22: #{tpu_custom_call.1} parent=1 // pred_check
      _
    $region23: #{tpu_custom_call.1} parent=1 // pred_check_branch
      %36 = sbr.rel (0) target = $region25
    $region24: #{tpu_custom_call.1} parent=1 // pred_region
      _
    $region25: #{tpu_custom_call.1} parent=1 // pred_fallthru
      _
    // Predicated region
    $region26: #{tpu_custom_call.1} parent=1 // pred_check
      _
    $region27: #{tpu_custom_call.1} parent=1 // pred_check_branch
      %38 = sbr.rel (0) target = $region29
    $region28: #{tpu_custom_call.1} parent=1 // pred_region
      _
    $region29: #{tpu_custom_call.1} parent=1 // pred_fallthru
      _
    // Predicated region
    $region30: #{tpu_custom_call.1} parent=1 // pred_check
      _
    $region31: #{tpu_custom_call.1} parent=1 // pred_check_branch
      %40 = sbr.rel (0) target = $region33
    $region32: #{tpu_custom_call.1} parent=1 // pred_region
      %41 = dma.done [#allocation5], 256
    $region33: #{tpu_custom_call.1} parent=1 // pred_fallthru
      _
    %s43 = sld [smem:[#allocation3]]
    %v44 = vld [vmem:[%s1] sm:$0xf]
    %v45 = vld [vmem:[%s1 + $0x4] sm:$0xf]
    %v46 = vld [vmem:[%s1 + $0x8] sm:$0xf]
    %v47 = vld [vmem:[%s1 + $0xc] sm:$0xf]
    %v48 = vld [vmem:[%s2] sm:$0xf]
    %v49 = vld [vmem:[%s2 + $0x4] sm:$0xf]
    %v50 = vld [vmem:[%s2 + $0x8] sm:$0xf]
    %v51 = vld [vmem:[%s2 + $0xc] sm:$0xf]
    %v56 = vunpack.c.l.b16 %v44
    %v57 = vunpack.c.l.b16 %v45
    %v58 = vunpack.c.l.b16 %v46
    %v59 = vunpack.c.l.b16 %v47
    %v60 = vpack.c.b16 %v57, %v56
    %v61 = vpack.c.b16 %v59, %v58
    %v66 = vunpack.c.l.b16 %v48
    %v67 = vunpack.c.l.b16 %v49
    %v68 = vunpack.c.l.b16 %v50
    %v69 = vunpack.c.l.b16 %v51
    %v70 = vpack.c.b16 %v67, %v66
    %v71 = vpack.c.b16 %v69, %v68
    %vm74 = vcmask 261120
    %v76 = vsel %vm74, %v60, 0
    %v79 = vsel %vm74, %v61, 0
    %81 = vmatprep.subr.bf16.mxu0 0
    %82 = vmatpush1.bf16.msra.mxu0 0
    %83 = vmatprep.subr.bf16.mxu0 0
    %84 = vmatpush1.bf16.msra.mxu0 0
    %85 = vmatprep.subr.bf16.mxu0 0
    %86 = vmatpush1.bf16.msra.mxu0 0
    %87 = vmatprep.subr.bf16.mxu0 0
    %88 = vmatpush1.bf16.msra.mxu0 0
    %89 = vmatprep.subr.bf16.mxu0 0
    %90 = vmatpush1.bf16.msra.mxu0 0
    %91 = vmatprep.subr.bf16.mxu0 0
    %92 = vmatpush1.bf16.msra.mxu0 0
    %93 = vmatprep.subr.bf16.mxu0 0
    %94 = vmatpush1.bf16.msra.mxu0 %v71
    %95 = vmatprep.subr.bf16.mxu0 0
    %96 = vmatpush1.bf16.msra.mxu0 %v70
    %97 = vmatprep.subr.bf16.mxu0 0
    %98 = vmatpush2.bf16.msra.mxu0 0
    %99 = vmatprep.subr.bf16.mxu0 0
    %100 = vmatpush2.bf16.msra.mxu0 0
    %101 = vmatprep.subr.bf16.mxu0 0
    %102 = vmatpush2.bf16.msra.mxu0 0
    %103 = vmatprep.subr.bf16.mxu0 0
    %104 = vmatpush2.bf16.msra.mxu0 0
    %105 = vmatprep.subr.bf16.mxu0 0
    %106 = vmatpush2.bf16.msra.mxu0 0
    %107 = vmatprep.subr.bf16.mxu0 0
    %108 = vmatpush2.bf16.msra.mxu0 0
    %109 = vmatprep.subr.bf16.mxu0 0
    %110 = vmatpush2.bf16.msra.mxu0 0
    %111 = vmatprep.subr.bf16.mxu0 0
    %112 = vmatpush2.bf16.msra.mxu0 0
    %113 = vmatprep.mubr.bf16.mxu0 0
    %114 = vmatmul.mubr.bf16.gmra.mxu0 %v76
    %v115 = vpop.f32.mrf.mxu0
    %v116 = vadd.f32 0.0, %v115
    %v117 = vpop.f32.mrf.mxu0
    %v118 = vpop.f32.mrf.mxu0
    %v119 = vadd.f32 0.0, %v118
    %v120 = vpop.f32.mrf.mxu0
    %121 = vmatprep.mubr.bf16.mxu0 0
    %122 = vmatmul.mubr.bf16.gmra.mxu0 %v79
    %v123 = vpop.f32.mrf.mxu0
    %v124 = vadd.f32 0.0, %v123
    %v125 = vpop.f32.mrf.mxu0
    %v126 = vpop.f32.mrf.mxu0
    %v127 = vadd.f32 0.0, %v126
    %v128 = vpop.f32.mrf.mxu0
    %129 = vdwg.mxu0
    %v130 = vld [vmem:[%s3] sm:$0xf]
    %v131 = vld [vmem:[%s3 + $0x4] sm:$0xf]
    %v132 = vld [vmem:[%s3 + $0x8] sm:$0xf]
    %v133 = vld [vmem:[%s3 + $0xc] sm:$0xf]
    %v138 = vunpack.c.l.b16 %v130
    %v139 = vunpack.c.l.b16 %v131
    %v140 = vunpack.c.l.b16 %v132
    %v141 = vunpack.c.l.b16 %v133
    %v142 = vpack.c.b16 %v139, %v138
    %v143 = vpack.c.b16 %v141, %v140
    %146 = vmatprep.subr.bf16.mxu0 0
    %147 = vmatpush1.bf16.msra.mxu0 0
    %148 = vmatprep.subr.bf16.mxu0 0
    %149 = vmatpush1.bf16.msra.mxu0 0
    %150 = vmatprep.subr.bf16.mxu0 0
    %151 = vmatpush1.bf16.msra.mxu0 0
    %152 = vmatprep.subr.bf16.mxu0 0
    %153 = vmatpush1.bf16.msra.mxu0 0
    %154 = vmatprep.subr.bf16.mxu0 0
    %155 = vmatpush1.bf16.msra.mxu0 0
    %156 = vmatprep.subr.bf16.mxu0 0
    %157 = vmatpush1.bf16.msra.mxu0 0
    %158 = vmatprep.subr.bf16.mxu0 0
    %159 = vmatpush1.bf16.msra.mxu0 %v143
    %160 = vmatprep.subr.bf16.mxu0 0
    %161 = vmatpush1.bf16.msra.mxu0 %v142
    %162 = vmatprep.subr.bf16.mxu0 0
    %163 = vmatpush2.bf16.msra.mxu0 0
    %164 = vmatprep.subr.bf16.mxu0 0
    %165 = vmatpush2.bf16.msra.mxu0 0
    %166 = vmatprep.subr.bf16.mxu0 0
    %167 = vmatpush2.bf16.msra.mxu0 0
    %168 = vmatprep.subr.bf16.mxu0 0
    %169 = vmatpush2.bf16.msra.mxu0 0
    %170 = vmatprep.subr.bf16.mxu0 0
    %171 = vmatpush2.bf16.msra.mxu0 0
    %172 = vmatprep.subr.bf16.mxu0 0
    %173 = vmatpush2.bf16.msra.mxu0 0
    %174 = vmatprep.subr.bf16.mxu0 0
    %175 = vmatpush2.bf16.msra.mxu0 0
    %176 = vmatprep.subr.bf16.mxu0 0
    %177 = vmatpush2.bf16.msra.mxu0 0
    %178 = vmatprep.mubr.bf16.mxu0 0
    %179 = vmatmul.mubr.bf16.gmra.mxu0 %v76
    %v180 = vpop.f32.mrf.mxu0
    %v181 = vadd.f32 0.0, %v180
    %v182 = vpop.f32.mrf.mxu0
    %v183 = vpop.f32.mrf.mxu0
    %v184 = vadd.f32 0.0, %v183
    %v185 = vpop.f32.mrf.mxu0
    %186 = vmatprep.mubr.bf16.mxu0 0
    %187 = vmatmul.mubr.bf16.gmra.mxu0 %v79
    %v188 = vpop.f32.mrf.mxu0
    %v189 = vadd.f32 0.0, %v188
    %v190 = vpop.f32.mrf.mxu0
    %v191 = vpop.f32.mrf.mxu0
    %v192 = vadd.f32 0.0, %v191
    %v193 = vpop.f32.mrf.mxu0
    %194 = vdwg.mxu0
    %v195 = vld [vmem:[#allocation4] sm:$0xf]
    %v196 = vld [vmem:[#allocation4 + $0x4] sm:$0xf]
    %v197 = vld [vmem:[#allocation4 + $0x8] sm:$0xf]
    %v198 = vld [vmem:[#allocation4 + $0xc] sm:$0xf]
    %v203 = vunpack.c.l.b16 %v195
    %v204 = vunpack.c.l.b16 %v196
    %v205 = vunpack.c.l.b16 %v197
    %v206 = vunpack.c.l.b16 %v198
    %v207 = vpack.c.b16 %v204, %v203
    %v208 = vpack.c.b16 %v206, %v205
    %211 = vmatprep.subr.bf16.mxu0 0
    %212 = vmatpush1.bf16.msra.mxu0 0
    %213 = vmatprep.subr.bf16.mxu0 0
    %214 = vmatpush1.bf16.msra.mxu0 0
    %215 = vmatprep.subr.bf16.mxu0 0
    %216 = vmatpush1.bf16.msra.mxu0 0
    %217 = vmatprep.subr.bf16.mxu0 0
    %218 = vmatpush1.bf16.msra.mxu0 0
    %219 = vmatprep.subr.bf16.mxu0 0
    %220 = vmatpush1.bf16.msra.mxu0 0
    %221 = vmatprep.subr.bf16.mxu0 0
    %222 = vmatpush1.bf16.msra.mxu0 0
    %223 = vmatprep.subr.bf16.mxu0 0
    %224 = vmatpush1.bf16.msra.mxu0 %v208
    %225 = vmatprep.subr.bf16.mxu0 0
    %226 = vmatpush1.bf16.msra.mxu0 %v207
    %227 = vmatprep.subr.bf16.mxu0 0
    %228 = vmatpush2.bf16.msra.mxu0 0
    %229 = vmatprep.subr.bf16.mxu0 0
    %230 = vmatpush2.bf16.msra.mxu0 0
    %231 = vmatprep.subr.bf16.mxu0 0
    %232 = vmatpush2.bf16.msra.mxu0 0
    %233 = vmatprep.subr.bf16.mxu0 0
    %234 = vmatpush2.bf16.msra.mxu0 0
    %235 = vmatprep.subr.bf16.mxu0 0
    %236 = vmatpush2.bf16.msra.mxu0 0
    %237 = vmatprep.subr.bf16.mxu0 0
    %238 = vmatpush2.bf16.msra.mxu0 0
    %239 = vmatprep.subr.bf16.mxu0 0
    %240 = vmatpush2.bf16.msra.mxu0 0
    %241 = vmatprep.subr.bf16.mxu0 0
    %242 = vmatpush2.bf16.msra.mxu0 0
    %243 = vmatprep.mubr.bf16.mxu0 0
    %244 = vmatmul.mubr.bf16.gmra.mxu0 %v76
    %v245 = vpop.f32.mrf.mxu0
    %v246 = vadd.f32 0.0, %v245
    %v247 = vpop.f32.mrf.mxu0
    %v248 = vpop.f32.mrf.mxu0
    %v249 = vadd.f32 0.0, %v248
    %v250 = vpop.f32.mrf.mxu0
    %251 = vmatprep.mubr.bf16.mxu0 0
    %252 = vmatmul.mubr.bf16.gmra.mxu0 %v79
    %v253 = vpop.f32.mrf.mxu0
    %v254 = vadd.f32 0.0, %v253
    %v255 = vpop.f32.mrf.mxu0
    %v256 = vpop.f32.mrf.mxu0
    %v257 = vadd.f32 0.0, %v256
    %v258 = vpop.f32.mrf.mxu0
    %259 = vdwg.mxu0
    %v260 = vlaneseq
    %v261 = vshrl.u32 %v260, 7
    %v262 = vadd.s32 %v261, 8
    %v263 = vlaneseq
    %v264 = vand.u32 %v263, 127
    %vm265 = vcmp.eq.s32.totalorder %v261, %v264
    %vm266 = vcmp.eq.s32.totalorder %v262, %v264
    %v267 = vpack.c.bf16 %v119, %v116
    %v268 = vpack.c.bf16 %v184, %v181
    %vm269 = vcmask 130048
    %v271 = vsel %vm269, %v267, 0
    %v274 = vsel %vm269, %v268, 0
    %276 = vmatprep.subr.bf16.mxu0 0
    %277 = vmatpush1.bf16.xpose.msra.mxu0 0
    %278 = vmatprep.subr.bf16.mxu0 0
    %279 = vmatpush1.bf16.xpose.msra.mxu0 0
    %280 = vmatprep.subr.bf16.mxu0 0
    %281 = vmatpush1.bf16.xpose.msra.mxu0 0
    %282 = vmatprep.subr.bf16.mxu0 0
    %283 = vmatpush1.bf16.xpose.msra.mxu0 0
    %284 = vmatprep.subr.bf16.mxu0 0
    %285 = vmatpush1.bf16.xpose.msra.mxu0 0
    %286 = vmatprep.subr.bf16.mxu0 0
    %287 = vmatpush1.bf16.xpose.msra.mxu0 0
    %288 = vmatprep.subr.bf16.mxu0 0
    %289 = vmatpush1.bf16.xpose.msra.mxu0 0
    %290 = vmatprep.subr.bf16.mxu0 0
    %291 = vmatpush1.bf16.xpose.msra.mxu0 %v274
    %292 = vmatprep.subr.bf16.mxu0 0
    %293 = vmatpush2.bf16.xpose.msra.mxu0 0
    %294 = vmatprep.subr.bf16.mxu0 0
    %295 = vmatpush2.bf16.xpose.msra.mxu0 0
    %296 = vmatprep.subr.bf16.mxu0 0
    %297 = vmatpush2.bf16.xpose.msra.mxu0 0
    %298 = vmatprep.subr.bf16.mxu0 0
    %299 = vmatpush2.bf16.xpose.msra.mxu0 0
    %300 = vmatprep.subr.bf16.mxu0 0
    %301 = vmatpush2.bf16.xpose.msra.mxu0 0
    %302 = vmatprep.subr.bf16.mxu0 0
    %303 = vmatpush2.bf16.xpose.msra.mxu0 0
    %304 = vmatprep.subr.bf16.mxu0 0
    %305 = vmatpush2.bf16.xpose.msra.mxu0 0
    %306 = vmatprep.subr.bf16.mxu0 0
    %307 = vmatpush2.bf16.xpose.msra.mxu0 0
    %308 = vmatprep.mubr.bf16.mxu0 0
    %309 = vmatmul.mubr.bf16.gmra.mxu0 %v271
    %v310 = vpop.f32.mrf.mxu0
    %v311 = vadd.f32 0.0, %v310
    %v312 = vpop.f32.mrf.mxu0
    %v313 = vpop.f32.mrf.mxu0
    %v314 = vadd.f32 0.0, %v313
    %v315 = vpop.f32.mrf.mxu0
    %316 = vdwg.mxu0
    %v317 = vstv %s43
    %v318 = vmul.f32 %v311, %v317
    %v319 = vmul.f32 %v314, %v317
    %v320 = vsel %vm265, -1e+30, %v318
    %v321 = vsel %vm266, -1e+30, %v319
    %v322 = vsel %vm269, %v320, -inf
    %323 = vmax.xlane.f32.xlu0 %v322
    %v324 = vpop.xlane.xlu0 %323
    %v325 = vsel %vm269, %v321, -inf
    %326 = vmax.xlane.f32.xlu0 %v325
    %v327 = vpop.xlane.xlu0 %326
    %v328 = vsub.f32 %v320, %v324
    %v329 = vsub.f32 %v321, %v327
    %v330 = vmul.f32 %v328, 1.442695
    %v331 = vpow.pop %v330
    %v332 = vmul.f32 %v329, 1.442695
    %v333 = vpow.pop %v332
    %v334 = vsel %vm269, %v331, 0.0
    %335 = vadd.xlane.f32.xlu0 %v334
    %v336 = vpop.xlane.xlu0 %335
    %v337 = vsel %vm269, %v333, 0.0
    %338 = vadd.xlane.f32.xlu0 %v337
    %v339 = vpop.xlane.xlu0 %338
    %v340 = vrcp.pop %v336
    %v341 = vrcp.pop %v339
    %v342 = vmul.f32 %v331, %v340
    %v343 = vmul.f32 %v333, %v341
    %v344 = vpack.c.bf16 %v343, %v342
    %v345 = vpack.c.bf16 %v249, %v246
    %v347 = vsel %vm269, %v344, 0
    %349 = vmatprep.subr.bf16.mxu0 0
    %350 = vmatpush1.bf16.msra.mxu0 0
    %351 = vmatprep.subr.bf16.mxu0 0
    %352 = vmatpush1.bf16.msra.mxu0 0
    %353 = vmatprep.subr.bf16.mxu0 0
    %354 = vmatpush1.bf16.msra.mxu0 0
    %355 = vmatprep.subr.bf16.mxu0 0
    %356 = vmatpush1.bf16.msra.mxu0 0
    %357 = vmatprep.subr.bf16.mxu0 0
    %358 = vmatpush1.bf16.msra.mxu0 0
    %359 = vmatprep.subr.bf16.mxu0 0
    %360 = vmatpush1.bf16.msra.mxu0 0
    %361 = vmatprep.subr.bf16.mxu0 0
    %362 = vmatpush1.bf16.msra.mxu0 0
    %363 = vmatprep.subr.bf16.mxu0 0
    %364 = vmatpush1.bf16.msra.mxu0 %v345
    %365 = vmatprep.subr.bf16.mxu0 0
    %366 = vmatpush2.bf16.msra.mxu0 0
    %367 = vmatprep.subr.bf16.mxu0 0
    %368 = vmatpush2.bf16.msra.mxu0 0
    %369 = vmatprep.subr.bf16.mxu0 0
    %370 = vmatpush2.bf16.msra.mxu0 0
    %371 = vmatprep.subr.bf16.mxu0 0
    %372 = vmatpush2.bf16.msra.mxu0 0
    %373 = vmatprep.subr.bf16.mxu0 0
    %374 = vmatpush2.bf16.msra.mxu0 0
    %375 = vmatprep.subr.bf16.mxu0 0
    %376 = vmatpush2.bf16.msra.mxu0 0
    %377 = vmatprep.subr.bf16.mxu0 0
    %378 = vmatpush2.bf16.msra.mxu0 0
    %379 = vmatprep.subr.bf16.mxu0 0
    %380 = vmatpush2.bf16.msra.mxu0 0
    %381 = vmatprep.mubr.bf16.mxu0 0
    %382 = vmatmul.mubr.bf16.gmra.mxu0 %v347
    %v383 = vpop.f32.mrf.mxu0
    %v384 = vadd.f32 0.0, %v383
    %v385 = vpop.f32.mrf.mxu0
    %v386 = vpop.f32.mrf.mxu0
    %v387 = vadd.f32 0.0, %v386
    %v388 = vpop.f32.mrf.mxu0
    %389 = vdwg.mxu0
    %390 = vst.msk [vmem:[#allocation2] sm:$0xff] %vm269, %v384
    %391 = vst.msk [vmem:[#allocation2 + $0x8] sm:$0xff] %vm269, %v387
    %393 = vrot.lane.b32.xlu0 %v267, 112
    %v394 = vpop.permute.xlu0 %393
    %396 = vrot.lane.b32.xlu0 %v268, 112
    %v397 = vpop.permute.xlu0 %396
    %v399 = vsel %vm269, %v394, 0
    %v402 = vsel %vm269, %v397, 0
    %404 = vmatprep.subr.bf16.mxu0 0
    %405 = vmatpush1.bf16.xpose.msra.mxu0 0
    %406 = vmatprep.subr.bf16.mxu0 0
    %407 = vmatpush1.bf16.xpose.msra.mxu0 0
    %408 = vmatprep.subr.bf16.mxu0 0
    %409 = vmatpush1.bf16.xpose.msra.mxu0 0
    %410 = vmatprep.subr.bf16.mxu0 0
    %411 = vmatpush1.bf16.xpose.msra.mxu0 0
    %412 = vmatprep.subr.bf16.mxu0 0
    %413 = vmatpush1.bf16.xpose.msra.mxu0 0
    %414 = vmatprep.subr.bf16.mxu0 0
    %415 = vmatpush1.bf16.xpose.msra.mxu0 0
    %416 = vmatprep.subr.bf16.mxu0 0
    %417 = vmatpush1.bf16.xpose.msra.mxu0 0
    %418 = vmatprep.subr.bf16.mxu0 0
    %419 = vmatpush1.bf16.xpose.msra.mxu0 %v402
    %420 = vmatprep.subr.bf16.mxu0 0
    %421 = vmatpush2.bf16.xpose.msra.mxu0 0
    %422 = vmatprep.subr.bf16.mxu0 0
    %423 = vmatpush2.bf16.xpose.msra.mxu0 0
    %424 = vmatprep.subr.bf16.mxu0 0
    %425 = vmatpush2.bf16.xpose.msra.mxu0 0
    %426 = vmatprep.subr.bf16.mxu0 0
    %427 = vmatpush2.bf16.xpose.msra.mxu0 0
    %428 = vmatprep.subr.bf16.mxu0 0
    %429 = vmatpush2.bf16.xpose.msra.mxu0 0
    %430 = vmatprep.subr.bf16.mxu0 0
    %431 = vmatpush2.bf16.xpose.msra.mxu0 0
    %432 = vmatprep.subr.bf16.mxu0 0
    %433 = vmatpush2.bf16.xpose.msra.mxu0 0
    %434 = vmatprep.subr.bf16.mxu0 0
    %435 = vmatpush2.bf16.xpose.msra.mxu0 0
    %436 = vmatprep.mubr.bf16.mxu0 0
    %437 = vmatmul.mubr.bf16.gmra.mxu0 %v399
    %v438 = vpop.f32.mrf.mxu0
    %v439 = vadd.f32 0.0, %v438
    %v440 = vpop.f32.mrf.mxu0
    %v441 = vpop.f32.mrf.mxu0
    %v442 = vadd.f32 0.0, %v441
    %v443 = vpop.f32.mrf.mxu0
    %444 = vdwg.mxu0
    %v445 = vmul.f32 %v439, %v317
    %v446 = vmul.f32 %v442, %v317
    %v447 = vsel %vm265, -1e+30, %v445
    %v448 = vsel %vm266, -1e+30, %v446
    %v449 = vsel %vm269, %v447, -inf
    %450 = vmax.xlane.f32.xlu0 %v449
    %v451 = vpop.xlane.xlu0 %450
    %v452 = vsel %vm269, %v448, -inf
    %453 = vmax.xlane.f32.xlu0 %v452
    %v454 = vpop.xlane.xlu0 %453
    %v455 = vsub.f32 %v447, %v451
    %v456 = vsub.f32 %v448, %v454
    %v457 = vmul.f32 %v455, 1.442695
    %v458 = vpow.pop %v457
    %v459 = vmul.f32 %v456, 1.442695
    %v460 = vpow.pop %v459
    %v461 = vsel %vm269, %v458, 0.0
    %462 = vadd.xlane.f32.xlu0 %v461
    %v463 = vpop.xlane.xlu0 %462
    %v464 = vsel %vm269, %v460, 0.0
    %465 = vadd.xlane.f32.xlu0 %v464
    %v466 = vpop.xlane.xlu0 %465
    %v467 = vrcp.pop %v463
    %v468 = vrcp.pop %v466
    %v469 = vmul.f32 %v458, %v467
    %v470 = vmul.f32 %v460, %v468
    %v471 = vpack.c.bf16 %v470, %v469
    %473 = vrot.lane.b32.xlu0 %v345, 112
    %v474 = vpop.permute.xlu0 %473
    %v477 = vsel %vm269, %v471, 0
    %479 = vmatprep.subr.bf16.mxu0 0
    %480 = vmatpush1.bf16.msra.mxu0 0
    %481 = vmatprep.subr.bf16.mxu0 0
    %482 = vmatpush1.bf16.msra.mxu0 0
    %483 = vmatprep.subr.bf16.mxu0 0
    %484 = vmatpush1.bf16.msra.mxu0 0
    %485 = vmatprep.subr.bf16.mxu0 0
    %486 = vmatpush1.bf16.msra.mxu0 0
    %487 = vmatprep.subr.bf16.mxu0 0
    %488 = vmatpush1.bf16.msra.mxu0 0
    %489 = vmatprep.subr.bf16.mxu0 0
    %490 = vmatpush1.bf16.msra.mxu0 0
    %491 = vmatprep.subr.bf16.mxu0 0
    %492 = vmatpush1.bf16.msra.mxu0 0
    %493 = vmatprep.subr.bf16.mxu0 0
    %494 = vmatpush1.bf16.msra.mxu0 %v474
    %495 = vmatprep.subr.bf16.mxu0 0
    %496 = vmatpush2.bf16.msra.mxu0 0
    %497 = vmatprep.subr.bf16.mxu0 0
    %498 = vmatpush2.bf16.msra.mxu0 0
    %499 = vmatprep.subr.bf16.mxu0 0
    %500 = vmatpush2.bf16.msra.mxu0 0
    %501 = vmatprep.subr.bf16.mxu0 0
    %502 = vmatpush2.bf16.msra.mxu0 0
    %503 = vmatprep.subr.bf16.mxu0 0
    %504 = vmatpush2.bf16.msra.mxu0 0
    %505 = vmatprep.subr.bf16.mxu0 0
    %506 = vmatpush2.bf16.msra.mxu0 0
    %507 = vmatprep.subr.bf16.mxu0 0
    %508 = vmatpush2.bf16.msra.mxu0 0
    %509 = vmatprep.subr.bf16.mxu0 0
    %510 = vmatpush2.bf16.msra.mxu0 0
    %511 = vmatprep.mubr.bf16.mxu0 0
    %512 = vmatmul.mubr.bf16.gmra.mxu0 %v477
    %v513 = vpop.f32.mrf.mxu0
    %v514 = vadd.f32 0.0, %v513
    %v515 = vpop.f32.mrf.mxu0
    %v516 = vpop.f32.mrf.mxu0
    %v517 = vadd.f32 0.0, %v516
    %v518 = vpop.f32.mrf.mxu0
    %519 = vdwg.mxu0
    %522 = vrot.lane.b32.xlu0 %v514, 16
    %v523 = vpop.permute.xlu0 %522
    %524 = vrot.lane.b32.xlu0 %v517, 16
    %v525 = vpop.permute.xlu0 %524
    %vm528 = vcmask 261248
    %529 = vst.msk [vmem:[#allocation2] sm:$0xff] %vm528, %v523
    %530 = vst.msk [vmem:[#allocation2 + $0x8] sm:$0xff] %vm528, %v525
    %531 = vrot.lane.b32.xlu0 %v267, 96
    %v532 = vpop.permute.xlu0 %531
    %533 = vrot.lane.b32.xlu0 %v268, 96
    %v534 = vpop.permute.xlu0 %533
    %v536 = vsel %vm269, %v532, 0
    %v539 = vsel %vm269, %v534, 0
    %541 = vmatprep.subr.bf16.mxu0 0
    %542 = vmatpush1.bf16.xpose.msra.mxu0 0
    %543 = vmatprep.subr.bf16.mxu0 0
    %544 = vmatpush1.bf16.xpose.msra.mxu0 0
    %545 = vmatprep.subr.bf16.mxu0 0
    %546 = vmatpush1.bf16.xpose.msra.mxu0 0
    %547 = vmatprep.subr.bf16.mxu0 0
    %548 = vmatpush1.bf16.xpose.msra.mxu0 0
    %549 = vmatprep.subr.bf16.mxu0 0
    %550 = vmatpush1.bf16.xpose.msra.mxu0 0
    %551 = vmatprep.subr.bf16.mxu0 0
    %552 = vmatpush1.bf16.xpose.msra.mxu0 0
    %553 = vmatprep.subr.bf16.mxu0 0
    %554 = vmatpush1.bf16.xpose.msra.mxu0 0
    %555 = vmatprep.subr.bf16.mxu0 0
    %556 = vmatpush1.bf16.xpose.msra.mxu0 %v539
    %557 = vmatprep.subr.bf16.mxu0 0
    %558 = vmatpush2.bf16.xpose.msra.mxu0 0
    %559 = vmatprep.subr.bf16.mxu0 0
    %560 = vmatpush2.bf16.xpose.msra.mxu0 0
    %561 = vmatprep.subr.bf16.mxu0 0
    %562 = vmatpush2.bf16.xpose.msra.mxu0 0
    %563 = vmatprep.subr.bf16.mxu0 0
    %564 = vmatpush2.bf16.xpose.msra.mxu0 0
    %565 = vmatprep.subr.bf16.mxu0 0
    %566 = vmatpush2.bf16.xpose.msra.mxu0 0
    %567 = vmatprep.subr.bf16.mxu0 0
    %568 = vmatpush2.bf16.xpose.msra.mxu0 0
    %569 = vmatprep.subr.bf16.mxu0 0
    %570 = vmatpush2.bf16.xpose.msra.mxu0 0
    %571 = vmatprep.subr.bf16.mxu0 0
    %572 = vmatpush2.bf16.xpose.msra.mxu0 0
    %573 = vmatprep.mubr.bf16.mxu0 0
    %574 = vmatmul.mubr.bf16.gmra.mxu0 %v536
    %v575 = vpop.f32.mrf.mxu0
    %v576 = vadd.f32 0.0, %v575
    %v577 = vpop.f32.mrf.mxu0
    %v578 = vpop.f32.mrf.mxu0
    %v579 = vadd.f32 0.0, %v578
    %v580 = vpop.f32.mrf.mxu0
    %581 = vdwg.mxu0
    %v582 = vmul.f32 %v576, %v317
    %v583 = vmul.f32 %v579, %v317
    %v584 = vsel %vm265, -1e+30, %v582
    %v585 = vsel %vm266, -1e+30, %v583
    %v586 = vsel %vm269, %v584, -inf
    %587 = vmax.xlane.f32.xlu0 %v586
    %v588 = vpop.xlane.xlu0 %587
    %v589 = vsel %vm269, %v585, -inf
    %590 = vmax.xlane.f32.xlu0 %v589
    %v591 = vpop.xlane.xlu0 %590
    %v592 = vsub.f32 %v584, %v588
    %v593 = vsub.f32 %v585, %v591
    %v594 = vmul.f32 %v592, 1.442695
    %v595 = vpow.pop %v594
    %v596 = vmul.f32 %v593, 1.442695
    %v597 = vpow.pop %v596
    %v598 = vsel %vm269, %v595, 0.0
    %599 = vadd.xlane.f32.xlu0 %v598
    %v600 = vpop.xlane.xlu0 %599
    %v601 = vsel %vm269, %v597, 0.0
    %602 = vadd.xlane.f32.xlu0 %v601
    %v603 = vpop.xlane.xlu0 %602
    %v604 = vrcp.pop %v600
    %v605 = vrcp.pop %v603
    %v606 = vmul.f32 %v595, %v604
    %v607 = vmul.f32 %v597, %v605
    %v608 = vpack.c.bf16 %v607, %v606
    %609 = vrot.lane.b32.xlu0 %v345, 96
    %v610 = vpop.permute.xlu0 %609
    %v613 = vsel %vm269, %v608, 0
    %615 = vmatprep.subr.bf16.mxu0 0
    %616 = vmatpush1.bf16.msra.mxu0 0
    %617 = vmatprep.subr.bf16.mxu0 0
    %618 = vmatpush1.bf16.msra.mxu0 0
    %619 = vmatprep.subr.bf16.mxu0 0
    %620 = vmatpush1.bf16.msra.mxu0 0
    %621 = vmatprep.subr.bf16.mxu0 0
    %622 = vmatpush1.bf16.msra.mxu0 0
    %623 = vmatprep.subr.bf16.mxu0 0
    %624 = vmatpush1.bf16.msra.mxu0 0
    %625 = vmatprep.subr.bf16.mxu0 0
    %626 = vmatpush1.bf16.msra.mxu0 0
    %627 = vmatprep.subr.bf16.mxu0 0
    %628 = vmatpush1.bf16.msra.mxu0 0
    %629 = vmatprep.subr.bf16.mxu0 0
    %630 = vmatpush1.bf16.msra.mxu0 %v610
    %631 = vmatprep.subr.bf16.mxu0 0
    %632 = vmatpush2.bf16.msra.mxu0 0
    %633 = vmatprep.subr.bf16.mxu0 0
    %634 = vmatpush2.bf16.msra.mxu0 0
    %635 = vmatprep.subr.bf16.mxu0 0
    %636 = vmatpush2.bf16.msra.mxu0 0
    %637 = vmatprep.subr.bf16.mxu0 0
    %638 = vmatpush2.bf16.msra.mxu0 0
    %639 = vmatprep.subr.bf16.mxu0 0
    %640 = vmatpush2.bf16.msra.mxu0 0
    %641 = vmatprep.subr.bf16.mxu0 0
    %642 = vmatpush2.bf16.msra.mxu0 0
    %643 = vmatprep.subr.bf16.mxu0 0
    %644 = vmatpush2.bf16.msra.mxu0 0
    %645 = vmatprep.subr.bf16.mxu0 0
    %646 = vmatpush2.bf16.msra.mxu0 0
    %647 = vmatprep.mubr.bf16.mxu0 0
    %648 = vmatmul.mubr.bf16.gmra.mxu0 %v613
    %v649 = vpop.f32.mrf.mxu0
    %v650 = vadd.f32 0.0, %v649
    %v651 = vpop.f32.mrf.mxu0
    %v652 = vpop.f32.mrf.mxu0
    %v653 = vadd.f32 0.0, %v652
    %v654 = vpop.f32.mrf.mxu0
    %655 = vdwg.mxu0
    %658 = vrot.lane.b32.xlu0 %v650, 32
    %v659 = vpop.permute.xlu0 %658
    %660 = vrot.lane.b32.xlu0 %v653, 32
    %v661 = vpop.permute.xlu0 %660
    %vm664 = vcmask 392448
    %665 = vst.msk [vmem:[#allocation2] sm:$0xff] %vm664, %v659
    %666 = vst.msk [vmem:[#allocation2 + $0x8] sm:$0xff] %vm664, %v661
    %667 = vrot.lane.b32.xlu0 %v267, 80
    %v668 = vpop.permute.xlu0 %667
    %669 = vrot.lane.b32.xlu0 %v268, 80
    %v670 = vpop.permute.xlu0 %669
    %v672 = vsel %vm269, %v668, 0
    %v675 = vsel %vm269, %v670, 0
    %677 = vmatprep.subr.bf16.mxu0 0
    %678 = vmatpush1.bf16.xpose.msra.mxu0 0
    %679 = vmatprep.subr.bf16.mxu0 0
    %680 = vmatpush1.bf16.xpose.msra.mxu0 0
    %681 = vmatprep.subr.bf16.mxu0 0
    %682 = vmatpush1.bf16.xpose.msra.mxu0 0
    %683 = vmatprep.subr.bf16.mxu0 0
    %684 = vmatpush1.bf16.xpose.msra.mxu0 0
    %685 = vmatprep.subr.bf16.mxu0 0
    %686 = vmatpush1.bf16.xpose.msra.mxu0 0
    %687 = vmatprep.subr.bf16.mxu0 0
    %688 = vmatpush1.bf16.xpose.msra.mxu0 0
    %689 = vmatprep.subr.bf16.mxu0 0
    %690 = vmatpush1.bf16.xpose.msra.mxu0 0
    %691 = vmatprep.subr.bf16.mxu0 0
    %692 = vmatpush1.bf16.xpose.msra.mxu0 %v675
    %693 = vmatprep.subr.bf16.mxu0 0
    %694 = vmatpush2.bf16.xpose.msra.mxu0 0
    %695 = vmatprep.subr.bf16.mxu0 0
    %696 = vmatpush2.bf16.xpose.msra.mxu0 0
    %697 = vmatprep.subr.bf16.mxu0 0
    %698 = vmatpush2.bf16.xpose.msra.mxu0 0
    %699 = vmatprep.subr.bf16.mxu0 0
    %700 = vmatpush2.bf16.xpose.msra.mxu0 0
    %701 = vmatprep.subr.bf16.mxu0 0
    %702 = vmatpush2.bf16.xpose.msra.mxu0 0
    %703 = vmatprep.subr.bf16.mxu0 0
    %704 = vmatpush2.bf16.xpose.msra.mxu0 0
    %705 = vmatprep.subr.bf16.mxu0 0
    %706 = vmatpush2.bf16.xpose.msra.mxu0 0
    %707 = vmatprep.subr.bf16.mxu0 0
    %708 = vmatpush2.bf16.xpose.msra.mxu0 0
    %709 = vmatprep.mubr.bf16.mxu0 0
    %710 = vmatmul.mubr.bf16.gmra.mxu0 %v672
    %v711 = vpop.f32.mrf.mxu0
    %v712 = vadd.f32 0.0, %v711
    %v713 = vpop.f32.mrf.mxu0
    %v714 = vpop.f32.mrf.mxu0
    %v715 = vadd.f32 0.0, %v714
    %v716 = vpop.f32.mrf.mxu0
    %717 = vdwg.mxu0
    %v718 = vmul.f32 %v712, %v317
    %v719 = vmul.f32 %v715, %v317
    %v720 = vsel %vm265, -1e+30, %v718
    %v721 = vsel %vm266, -1e+30, %v719
    %v722 = vsel %vm269, %v720, -inf
    %723 = vmax.xlane.f32.xlu0 %v722
    %v724 = vpop.xlane.xlu0 %723
    %v725 = vsel %vm269, %v721, -inf
    %726 = vmax.xlane.f32.xlu0 %v725
    %v727 = vpop.xlane.xlu0 %726
    %v728 = vsub.f32 %v720, %v724
    %v729 = vsub.f32 %v721, %v727
    %v730 = vmul.f32 %v728, 1.442695
    %v731 = vpow.pop %v730
    %v732 = vmul.f32 %v729, 1.442695
    %v733 = vpow.pop %v732
    %v734 = vsel %vm269, %v731, 0.0
    %735 = vadd.xlane.f32.xlu0 %v734
    %v736 = vpop.xlane.xlu0 %735
    %v737 = vsel %vm269, %v733, 0.0
    %738 = vadd.xlane.f32.xlu0 %v737
    %v739 = vpop.xlane.xlu0 %738
    %v740 = vrcp.pop %v736
    %v741 = vrcp.pop %v739
    %v742 = vmul.f32 %v731, %v740
    %v743 = vmul.f32 %v733, %v741
    %v744 = vpack.c.bf16 %v743, %v742
    %745 = vrot.lane.b32.xlu0 %v345, 80
    %v746 = vpop.permute.xlu0 %745
    %v749 = vsel %vm269, %v744, 0
    %751 = vmatprep.subr.bf16.mxu0 0
    %752 = vmatpush1.bf16.msra.mxu0 0
    %753 = vmatprep.subr.bf16.mxu0 0
    %754 = vmatpush1.bf16.msra.mxu0 0
    %755 = vmatprep.subr.bf16.mxu0 0
    %756 = vmatpush1.bf16.msra.mxu0 0
    %757 = vmatprep.subr.bf16.mxu0 0
    %758 = vmatpush1.bf16.msra.mxu0 0
    %759 = vmatprep.subr.bf16.mxu0 0
    %760 = vmatpush1.bf16.msra.mxu0 0
    %761 = vmatprep.subr.bf16.mxu0 0
    %762 = vmatpush1.bf16.msra.mxu0 0
    %763 = vmatprep.subr.bf16.mxu0 0
    %764 = vmatpush1.bf16.msra.mxu0 0
    %765 = vmatprep.subr.bf16.mxu0 0
    %766 = vmatpush1.bf16.msra.mxu0 %v746
    %767 = vmatprep.subr.bf16.mxu0 0
    %768 = vmatpush2.bf16.msra.mxu0 0
    %769 = vmatprep.subr.bf16.mxu0 0
    %770 = vmatpush2.bf16.msra.mxu0 0
    %771 = vmatprep.subr.bf16.mxu0 0
    %772 = vmatpush2.bf16.msra.mxu0 0
    %773 = vmatprep.subr.bf16.mxu0 0
    %774 = vmatpush2.bf16.msra.mxu0 0
    %775 = vmatprep.subr.bf16.mxu0 0
    %776 = vmatpush2.bf16.msra.mxu0 0
    %777 = vmatprep.subr.bf16.mxu0 0
    %778 = vmatpush2.bf16.msra.mxu0 0
    %779 = vmatprep.subr.bf16.mxu0 0
    %780 = vmatpush2.bf16.msra.mxu0 0
    %781 = vmatprep.subr.bf16.mxu0 0
    %782 = vmatpush2.bf16.msra.mxu0 0
    %783 = vmatprep.mubr.bf16.mxu0 0
    %784 = vmatmul.mubr.bf16.gmra.mxu0 %v749
    %v785 = vpop.f32.mrf.mxu0
    %v786 = vadd.f32 0.0, %v785
    %v787 = vpop.f32.mrf.mxu0
    %v788 = vpop.f32.mrf.mxu0
    %v789 = vadd.f32 0.0, %v788
    %v790 = vpop.f32.mrf.mxu0
    %791 = vdwg.mxu0
    %794 = vrot.lane.b32.xlu0 %v786, 48
    %v795 = vpop.permute.xlu0 %794
    %796 = vrot.lane.b32.xlu0 %v789, 48
    %v797 = vpop.permute.xlu0 %796
    %vm800 = vcmask 523648
    %801 = vst.msk [vmem:[#allocation2] sm:$0xff] %vm800, %v795
    %802 = vst.msk [vmem:[#allocation2 + $0x8] sm:$0xff] %vm800, %v797
    %v803 = vpack.c.bf16 %v127, %v124
    %v804 = vpack.c.bf16 %v192, %v189
    %v806 = vsel %vm269, %v803, 0
    %v809 = vsel %vm269, %v804, 0
    %811 = vmatprep.subr.bf16.mxu0 0
    %812 = vmatpush1.bf16.xpose.msra.mxu0 0
    %813 = vmatprep.subr.bf16.mxu0 0
    %814 = vmatpush1.bf16.xpose.msra.mxu0 0
    %815 = vmatprep.subr.bf16.mxu0 0
    %816 = vmatpush1.bf16.xpose.msra.mxu0 0
    %817 = vmatprep.subr.bf16.mxu0 0
    %818 = vmatpush1.bf16.xpose.msra.mxu0 0
    %819 = vmatprep.subr.bf16.mxu0 0
    %820 = vmatpush1.bf16.xpose.msra.mxu0 0
    %821 = vmatprep.subr.bf16.mxu0 0
    %822 = vmatpush1.bf16.xpose.msra.mxu0 0
    %823 = vmatprep.subr.bf16.mxu0 0
    %824 = vmatpush1.bf16.xpose.msra.mxu0 0
    %825 = vmatprep.subr.bf16.mxu0 0
    %826 = vmatpush1.bf16.xpose.msra.mxu0 %v809
    %827 = vmatprep.subr.bf16.mxu0 0
    %828 = vmatpush2.bf16.xpose.msra.mxu0 0
    %829 = vmatprep.subr.bf16.mxu0 0
    %830 = vmatpush2.bf16.xpose.msra.mxu0 0
    %831 = vmatprep.subr.bf16.mxu0 0
    %832 = vmatpush2.bf16.xpose.msra.mxu0 0
    %833 = vmatprep.subr.bf16.mxu0 0
    %834 = vmatpush2.bf16.xpose.msra.mxu0 0
    %835 = vmatprep.subr.bf16.mxu0 0
    %836 = vmatpush2.bf16.xpose.msra.mxu0 0
    %837 = vmatprep.subr.bf16.mxu0 0
    %838 = vmatpush2.bf16.xpose.msra.mxu0 0
    %839 = vmatprep.subr.bf16.mxu0 0
    %840 = vmatpush2.bf16.xpose.msra.mxu0 0
    %841 = vmatprep.subr.bf16.mxu0 0
    %842 = vmatpush2.bf16.xpose.msra.mxu0 0
    %843 = vmatprep.mubr.bf16.mxu0 0
    %844 = vmatmul.mubr.bf16.gmra.mxu0 %v806
    %v845 = vpop.f32.mrf.mxu0
    %v846 = vadd.f32 0.0, %v845
    %v847 = vpop.f32.mrf.mxu0
    %v848 = vpop.f32.mrf.mxu0
    %v849 = vadd.f32 0.0, %v848
    %v850 = vpop.f32.mrf.mxu0
    %851 = vdwg.mxu0
    %v852 = vmul.f32 %v846, %v317
    %v853 = vmul.f32 %v849, %v317
    %v854 = vsel %vm265, -1e+30, %v852
    %v855 = vsel %vm266, -1e+30, %v853
    %v856 = vsel %vm269, %v854, -inf
    %857 = vmax.xlane.f32.xlu0 %v856
    %v858 = vpop.xlane.xlu0 %857
    %v859 = vsel %vm269, %v855, -inf
    %860 = vmax.xlane.f32.xlu0 %v859
    %v861 = vpop.xlane.xlu0 %860
    %v862 = vsub.f32 %v854, %v858
    %v863 = vsub.f32 %v855, %v861
    %v864 = vmul.f32 %v862, 1.442695
    %v865 = vpow.pop %v864
    %v866 = vmul.f32 %v863, 1.442695
    %v867 = vpow.pop %v866
    %v868 = vsel %vm269, %v865, 0.0
    %869 = vadd.xlane.f32.xlu0 %v868
    %v870 = vpop.xlane.xlu0 %869
    %v871 = vsel %vm269, %v867, 0.0
    %872 = vadd.xlane.f32.xlu0 %v871
    %v873 = vpop.xlane.xlu0 %872
    %v874 = vrcp.pop %v870
    %v875 = vrcp.pop %v873
    %v876 = vmul.f32 %v865, %v874
    %v877 = vmul.f32 %v867, %v875
    %v878 = vpack.c.bf16 %v877, %v876
    %v879 = vpack.c.bf16 %v257, %v254
    %v881 = vsel %vm269, %v878, 0
    %883 = vmatprep.subr.bf16.mxu0 0
    %884 = vmatpush1.bf16.msra.mxu0 0
    %885 = vmatprep.subr.bf16.mxu0 0
    %886 = vmatpush1.bf16.msra.mxu0 0
    %887 = vmatprep.subr.bf16.mxu0 0
    %888 = vmatpush1.bf16.msra.mxu0 0
    %889 = vmatprep.subr.bf16.mxu0 0
    %890 = vmatpush1.bf16.msra.mxu0 0
    %891 = vmatprep.subr.bf16.mxu0 0
    %892 = vmatpush1.bf16.msra.mxu0 0
    %893 = vmatprep.subr.bf16.mxu0 0
    %894 = vmatpush1.bf16.msra.mxu0 0
    %895 = vmatprep.subr.bf16.mxu0 0
    %896 = vmatpush1.bf16.msra.mxu0 0
    %897 = vmatprep.subr.bf16.mxu0 0
    %898 = vmatpush1.bf16.msra.mxu0 %v879
    %899 = vmatprep.subr.bf16.mxu0 0
    %900 = vmatpush2.bf16.msra.mxu0 0
    %901 = vmatprep.subr.bf16.mxu0 0
    %902 = vmatpush2.bf16.msra.mxu0 0
    %903 = vmatprep.subr.bf16.mxu0 0
    %904 = vmatpush2.bf16.msra.mxu0 0
    %905 = vmatprep.subr.bf16.mxu0 0
    %906 = vmatpush2.bf16.msra.mxu0 0
    %907 = vmatprep.subr.bf16.mxu0 0
    %908 = vmatpush2.bf16.msra.mxu0 0
    %909 = vmatprep.subr.bf16.mxu0 0
    %910 = vmatpush2.bf16.msra.mxu0 0
    %911 = vmatprep.subr.bf16.mxu0 0
    %912 = vmatpush2.bf16.msra.mxu0 0
    %913 = vmatprep.subr.bf16.mxu0 0
    %914 = vmatpush2.bf16.msra.mxu0 0
    %915 = vmatprep.mubr.bf16.mxu0 0
    %916 = vmatmul.mubr.bf16.gmra.mxu0 %v881
    %v917 = vpop.f32.mrf.mxu0
    %v918 = vadd.f32 0.0, %v917
    %v919 = vpop.f32.mrf.mxu0
    %v920 = vpop.f32.mrf.mxu0
    %v921 = vadd.f32 0.0, %v920
    %v922 = vpop.f32.mrf.mxu0
    %923 = vdwg.mxu0
    %924 = vst.msk [vmem:[#allocation2 + $0x10] sm:$0xff] %vm269, %v918
    %925 = vst.msk [vmem:[#allocation2 + $0x18] sm:$0xff] %vm269, %v921
    %927 = vrot.lane.b32.xlu0 %v803, 112
    %v928 = vpop.permute.xlu0 %927
    %930 = vrot.lane.b32.xlu0 %v804, 112
    %v931 = vpop.permute.xlu0 %930
    %v933 = vsel %vm269, %v928, 0
    %v936 = vsel %vm269, %v931, 0
    %938 = vmatprep.subr.bf16.mxu0 0
    %939 = vmatpush1.bf16.xpose.msra.mxu0 0
    %940 = vmatprep.subr.bf16.mxu0 0
    %941 = vmatpush1.bf16.xpose.msra.mxu0 0
    %942 = vmatprep.subr.bf16.mxu0 0
    %943 = vmatpush1.bf16.xpose.msra.mxu0 0
    %944 = vmatprep.subr.bf16.mxu0 0
    %945 = vmatpush1.bf16.xpose.msra.mxu0 0
    %946 = vmatprep.subr.bf16.mxu0 0
    %947 = vmatpush1.bf16.xpose.msra.mxu0 0
    %948 = vmatprep.subr.bf16.mxu0 0
    %949 = vmatpush1.bf16.xpose.msra.mxu0 0
    %950 = vmatprep.subr.bf16.mxu0 0
    %951 = vmatpush1.bf16.xpose.msra.mxu0 0
    %952 = vmatprep.subr.bf16.mxu0 0
    %953 = vmatpush1.bf16.xpose.msra.mxu0 %v936
    %954 = vmatprep.subr.bf16.mxu0 0
    %955 = vmatpush2.bf16.xpose.msra.mxu0 0
    %956 = vmatprep.subr.bf16.mxu0 0
    %957 = vmatpush2.bf16.xpose.msra.mxu0 0
    %958 = vmatprep.subr.bf16.mxu0 0
    %959 = vmatpush2.bf16.xpose.msra.mxu0 0
    %960 = vmatprep.subr.bf16.mxu0 0
    %961 = vmatpush2.bf16.xpose.msra.mxu0 0
    %962 = vmatprep.subr.bf16.mxu0 0
    %963 = vmatpush2.bf16.xpose.msra.mxu0 0
    %964 = vmatprep.subr.bf16.mxu0 0
    %965 = vmatpush2.bf16.xpose.msra.mxu0 0
    %966 = vmatprep.subr.bf16.mxu0 0
    %967 = vmatpush2.bf16.xpose.msra.mxu0 0
    %968 = vmatprep.subr.bf16.mxu0 0
    %969 = vmatpush2.bf16.xpose.msra.mxu0 0
    %970 = vmatprep.mubr.bf16.mxu0 0
    %971 = vmatmul.mubr.bf16.gmra.mxu0 %v933
    %v972 = vpop.f32.mrf.mxu0
    %v973 = vadd.f32 0.0, %v972
    %v974 = vpop.f32.mrf.mxu0
    %v975 = vpop.f32.mrf.mxu0
    %v976 = vadd.f32 0.0, %v975
    %v977 = vpop.f32.mrf.mxu0
    %978 = vdwg.mxu0
    %v979 = vmul.f32 %v973, %v317
    %v980 = vmul.f32 %v976, %v317
    %v981 = vsel %vm265, -1e+30, %v979
    %v982 = vsel %vm266, -1e+30, %v980
    %v983 = vsel %vm269, %v981, -inf
    %984 = vmax.xlane.f32.xlu0 %v983
    %v985 = vpop.xlane.xlu0 %984
    %v986 = vsel %vm269, %v982, -inf
    %987 = vmax.xlane.f32.xlu0 %v986
    %v988 = vpop.xlane.xlu0 %987
    %v989 = vsub.f32 %v981, %v985
    %v990 = vsub.f32 %v982, %v988
    %v991 = vmul.f32 %v989, 1.442695
    %v992 = vpow.pop %v991
    %v993 = vmul.f32 %v990, 1.442695
    %v994 = vpow.pop %v993
    %v995 = vsel %vm269, %v992, 0.0
    %996 = vadd.xlane.f32.xlu0 %v995
    %v997 = vpop.xlane.xlu0 %996
    %v998 = vsel %vm269, %v994, 0.0
    %999 = vadd.xlane.f32.xlu0 %v998
    %v1000 = vpop.xlane.xlu0 %999
    %v1001 = vrcp.pop %v997
    %v1002 = vrcp.pop %v1000
    %v1003 = vmul.f32 %v992, %v1001
    %v1004 = vmul.f32 %v994, %v1002
    %v1005 = vpack.c.bf16 %v1004, %v1003
    %1007 = vrot.lane.b32.xlu0 %v879, 112
    %v1008 = vpop.permute.xlu0 %1007
    %v1011 = vsel %vm269, %v1005, 0
    %1013 = vmatprep.subr.bf16.mxu0 0
    %1014 = vmatpush1.bf16.msra.mxu0 0
    %1015 = vmatprep.subr.bf16.mxu0 0
    %1016 = vmatpush1.bf16.msra.mxu0 0
    %1017 = vmatprep.subr.bf16.mxu0 0
    %1018 = vmatpush1.bf16.msra.mxu0 0
    %1019 = vmatprep.subr.bf16.mxu0 0
    %1020 = vmatpush1.bf16.msra.mxu0 0
    %1021 = vmatprep.subr.bf16.mxu0 0
    %1022 = vmatpush1.bf16.msra.mxu0 0
    %1023 = vmatprep.subr.bf16.mxu0 0
    %1024 = vmatpush1.bf16.msra.mxu0 0
    %1025 = vmatprep.subr.bf16.mxu0 0
    %1026 = vmatpush1.bf16.msra.mxu0 0
    %1027 = vmatprep.subr.bf16.mxu0 0
    %1028 = vmatpush1.bf16.msra.mxu0 %v1008
    %1029 = vmatprep.subr.bf16.mxu0 0
    %1030 = vmatpush2.bf16.msra.mxu0 0
    %1031 = vmatprep.subr.bf16.mxu0 0
    %1032 = vmatpush2.bf16.msra.mxu0 0
    %1033 = vmatprep.subr.bf16.mxu0 0
    %1034 = vmatpush2.bf16.msra.mxu0 0
    %1035 = vmatprep.subr.bf16.mxu0 0
    %1036 = vmatpush2.bf16.msra.mxu0 0
    %1037 = vmatprep.subr.bf16.mxu0 0
    %1038 = vmatpush2.bf16.msra.mxu0 0
    %1039 = vmatprep.subr.bf16.mxu0 0
    %1040 = vmatpush2.bf16.msra.mxu0 0
    %1041 = vmatprep.subr.bf16.mxu0 0
    %1042 = vmatpush2.bf16.msra.mxu0 0
    %1043 = vmatprep.subr.bf16.mxu0 0
    %1044 = vmatpush2.bf16.msra.mxu0 0
    %1045 = vmatprep.mubr.bf16.mxu0 0
    %1046 = vmatmul.mubr.bf16.gmra.mxu0 %v1011
    %v1047 = vpop.f32.mrf.mxu0
    %v1048 = vadd.f32 0.0, %v1047
    %v1049 = vpop.f32.mrf.mxu0
    %v1050 = vpop.f32.mrf.mxu0
    %v1051 = vadd.f32 0.0, %v1050
    %v1052 = vpop.f32.mrf.mxu0
    %1053 = vdwg.mxu0
    %1056 = vrot.lane.b32.xlu0 %v1048, 16
    %v1057 = vpop.permute.xlu0 %1056
    %1058 = vrot.lane.b32.xlu0 %v1051, 16
    %v1059 = vpop.permute.xlu0 %1058
    %1062 = vst.msk [vmem:[#allocation2 + $0x10] sm:$0xff] %vm528, %v1057
    %1063 = vst.msk [vmem:[#allocation2 + $0x18] sm:$0xff] %vm528, %v1059
    %1064 = vrot.lane.b32.xlu0 %v803, 96
    %v1065 = vpop.permute.xlu0 %1064
    %1066 = vrot.lane.b32.xlu0 %v804, 96
    %v1067 = vpop.permute.xlu0 %1066
    %v1069 = vsel %vm269, %v1065, 0
    %v1072 = vsel %vm269, %v1067, 0
    %1074 = vmatprep.subr.bf16.mxu0 0
    %1075 = vmatpush1.bf16.xpose.msra.mxu0 0
    %1076 = vmatprep.subr.bf16.mxu0 0
    %1077 = vmatpush1.bf16.xpose.msra.mxu0 0
    %1078 = vmatprep.subr.bf16.mxu0 0
    %1079 = vmatpush1.bf16.xpose.msra.mxu0 0
    %1080 = vmatprep.subr.bf16.mxu0 0
    %1081 = vmatpush1.bf16.xpose.msra.mxu0 0
    %1082 = vmatprep.subr.bf16.mxu0 0
    %1083 = vmatpush1.bf16.xpose.msra.mxu0 0
    %1084 = vmatprep.subr.bf16.mxu0 0
    %1085 = vmatpush1.bf16.xpose.msra.mxu0 0
    %1086 = vmatprep.subr.bf16.mxu0 0
    %1087 = vmatpush1.bf16.xpose.msra.mxu0 0
    %1088 = vmatprep.subr.bf16.mxu0 0
    %1089 = vmatpush1.bf16.xpose.msra.mxu0 %v1072
    %1090 = vmatprep.subr.bf16.mxu0 0
    %1091 = vmatpush2.bf16.xpose.msra.mxu0 0
    %1092 = vmatprep.subr.bf16.mxu0 0
    %1093 = vmatpush2.bf16.xpose.msra.mxu0 0
    %1094 = vmatprep.subr.bf16.mxu0 0
    %1095 = vmatpush2.bf16.xpose.msra.mxu0 0
    %1096 = vmatprep.subr.bf16.mxu0 0
    %1097 = vmatpush2.bf16.xpose.msra.mxu0 0
    %1098 = vmatprep.subr.bf16.mxu0 0
    %1099 = vmatpush2.bf16.xpose.msra.mxu0 0
    %1100 = vmatprep.subr.bf16.mxu0 0
    %1101 = vmatpush2.bf16.xpose.msra.mxu0 0
    %1102 = vmatprep.subr.bf16.mxu0 0
    %1103 = vmatpush2.bf16.xpose.msra.mxu0 0
    %1104 = vmatprep.subr.bf16.mxu0 0
    %1105 = vmatpush2.bf16.xpose.msra.mxu0 0
    %1106 = vmatprep.mubr.bf16.mxu0 0
    %1107 = vmatmul.mubr.bf16.gmra.mxu0 %v1069
    %v1108 = vpop.f32.mrf.mxu0
    %v1109 = vadd.f32 0.0, %v1108
    %v1110 = vpop.f32.mrf.mxu0
    %v1111 = vpop.f32.mrf.mxu0
    %v1112 = vadd.f32 0.0, %v1111
    %v1113 = vpop.f32.mrf.mxu0
    %1114 = vdwg.mxu0
    %v1115 = vmul.f32 %v1109, %v317
    %v1116 = vmul.f32 %v1112, %v317
    %v1117 = vsel %vm265, -1e+30, %v1115
    %v1118 = vsel %vm266, -1e+30, %v1116
    %v1119 = vsel %vm269, %v1117, -inf
    %1120 = vmax.xlane.f32.xlu0 %v1119
    %v1121 = vpop.xlane.xlu0 %1120
    %v1122 = vsel %vm269, %v1118, -inf
    %1123 = vmax.xlane.f32.xlu0 %v1122
    %v1124 = vpop.xlane.xlu0 %1123
    %v1125 = vsub.f32 %v1117, %v1121
    %v1126 = vsub.f32 %v1118, %v1124
    %v1127 = vmul.f32 %v1125, 1.442695
    %v1128 = vpow.pop %v1127
    %v1129 = vmul.f32 %v1126, 1.442695
    %v1130 = vpow.pop %v1129
    %v1131 = vsel %vm269, %v1128, 0.0
    %1132 = vadd.xlane.f32.xlu0 %v1131
    %v1133 = vpop.xlane.xlu0 %1132
    %v1134 = vsel %vm269, %v1130, 0.0
    %1135 = vadd.xlane.f32.xlu0 %v1134
    %v1136 = vpop.xlane.xlu0 %1135
    %v1137 = vrcp.pop %v1133
    %v1138 = vrcp.pop %v1136
    %v1139 = vmul.f32 %v1128, %v1137
    %v1140 = vmul.f32 %v1130, %v1138
    %v1141 = vpack.c.bf16 %v1140, %v1139
    %1142 = vrot.lane.b32.xlu0 %v879, 96
    %v1143 = vpop.permute.xlu0 %1142
    %v1146 = vsel %vm269, %v1141, 0
    %1148 = vmatprep.subr.bf16.mxu0 0
    %1149 = vmatpush1.bf16.msra.mxu0 0
    %1150 = vmatprep.subr.bf16.mxu0 0
    %1151 = vmatpush1.bf16.msra.mxu0 0
    %1152 = vmatprep.subr.bf16.mxu0 0
    %1153 = vmatpush1.bf16.msra.mxu0 0
    %1154 = vmatprep.subr.bf16.mxu0 0
    %1155 = vmatpush1.bf16.msra.mxu0 0
    %1156 = vmatprep.subr.bf16.mxu0 0
    %1157 = vmatpush1.bf16.msra.mxu0 0
    %1158 = vmatprep.subr.bf16.mxu0 0
    %1159 = vmatpush1.bf16.msra.mxu0 0
    %1160 = vmatprep.subr.bf16.mxu0 0
    %1161 = vmatpush1.bf16.msra.mxu0 0
    %1162 = vmatprep.subr.bf16.mxu0 0
    %1163 = vmatpush1.bf16.msra.mxu0 %v1143
    %1164 = vmatprep.subr.bf16.mxu0 0
    %1165 = vmatpush2.bf16.msra.mxu0 0
    %1166 = vmatprep.subr.bf16.mxu0 0
    %1167 = vmatpush2.bf16.msra.mxu0 0
    %1168 = vmatprep.subr.bf16.mxu0 0
    %1169 = vmatpush2.bf16.msra.mxu0 0
    %1170 = vmatprep.subr.bf16.mxu0 0
    %1171 = vmatpush2.bf16.msra.mxu0 0
    %1172 = vmatprep.subr.bf16.mxu0 0
    %1173 = vmatpush2.bf16.msra.mxu0 0
    %1174 = vmatprep.subr.bf16.mxu0 0
    %1175 = vmatpush2.bf16.msra.mxu0 0
    %1176 = vmatprep.subr.bf16.mxu0 0
    %1177 = vmatpush2.bf16.msra.mxu0 0
    %1178 = vmatprep.subr.bf16.mxu0 0
    %1179 = vmatpush2.bf16.msra.mxu0 0
    %1180 = vmatprep.mubr.bf16.mxu0 0
    %1181 = vmatmul.mubr.bf16.gmra.mxu0 %v1146
    %v1182 = vpop.f32.mrf.mxu0
    %v1183 = vadd.f32 0.0, %v1182
    %v1184 = vpop.f32.mrf.mxu0
    %v1185 = vpop.f32.mrf.mxu0
    %v1186 = vadd.f32 0.0, %v1185
    %v1187 = vpop.f32.mrf.mxu0
    %1188 = vdwg.mxu0
    %1191 = vrot.lane.b32.xlu0 %v1183, 32
    %v1192 = vpop.permute.xlu0 %1191
    %1193 = vrot.lane.b32.xlu0 %v1186, 32
    %v1194 = vpop.permute.xlu0 %1193
    %1197 = vst.msk [vmem:[#allocation2 + $0x10] sm:$0xff] %vm664, %v1192
    %1198 = vst.msk [vmem:[#allocation2 + $0x18] sm:$0xff] %vm664, %v1194
    %1199 = vrot.lane.b32.xlu0 %v803, 80
    %v1200 = vpop.permute.xlu0 %1199
    %1201 = vrot.lane.b32.xlu0 %v804, 80
    %v1202 = vpop.permute.xlu0 %1201
    %v1204 = vsel %vm269, %v1200, 0
    %v1207 = vsel %vm269, %v1202, 0
    %1209 = vmatprep.subr.bf16.mxu0 0
    %1210 = vmatpush1.bf16.xpose.msra.mxu0 0
    %1211 = vmatprep.subr.bf16.mxu0 0
    %1212 = vmatpush1.bf16.xpose.msra.mxu0 0
    %1213 = vmatprep.subr.bf16.mxu0 0
    %1214 = vmatpush1.bf16.xpose.msra.mxu0 0
    %1215 = vmatprep.subr.bf16.mxu0 0
    %1216 = vmatpush1.bf16.xpose.msra.mxu0 0
    %1217 = vmatprep.subr.bf16.mxu0 0
    %1218 = vmatpush1.bf16.xpose.msra.mxu0 0
    %1219 = vmatprep.subr.bf16.mxu0 0
    %1220 = vmatpush1.bf16.xpose.msra.mxu0 0
    %1221 = vmatprep.subr.bf16.mxu0 0
    %1222 = vmatpush1.bf16.xpose.msra.mxu0 0
    %1223 = vmatprep.subr.bf16.mxu0 0
    %1224 = vmatpush1.bf16.xpose.msra.mxu0 %v1207
    %1225 = vmatprep.subr.bf16.mxu0 0
    %1226 = vmatpush2.bf16.xpose.msra.mxu0 0
    %1227 = vmatprep.subr.bf16.mxu0 0
    %1228 = vmatpush2.bf16.xpose.msra.mxu0 0
    %1229 = vmatprep.subr.bf16.mxu0 0
    %1230 = vmatpush2.bf16.xpose.msra.mxu0 0
    %1231 = vmatprep.subr.bf16.mxu0 0
    %1232 = vmatpush2.bf16.xpose.msra.mxu0 0
    %1233 = vmatprep.subr.bf16.mxu0 0
    %1234 = vmatpush2.bf16.xpose.msra.mxu0 0
    %1235 = vmatprep.subr.bf16.mxu0 0
    %1236 = vmatpush2.bf16.xpose.msra.mxu0 0
    %1237 = vmatprep.subr.bf16.mxu0 0
    %1238 = vmatpush2.bf16.xpose.msra.mxu0 0
    %1239 = vmatprep.subr.bf16.mxu0 0
    %1240 = vmatpush2.bf16.xpose.msra.mxu0 0
    %1241 = vmatprep.mubr.bf16.mxu0 0
    %1242 = vmatmul.mubr.bf16.gmra.mxu0 %v1204
    %v1243 = vpop.f32.mrf.mxu0
    %v1244 = vadd.f32 0.0, %v1243
    %v1245 = vpop.f32.mrf.mxu0
    %v1246 = vpop.f32.mrf.mxu0
    %v1247 = vadd.f32 0.0, %v1246
    %v1248 = vpop.f32.mrf.mxu0
    %1249 = vdwg.mxu0
    %v1250 = vmul.f32 %v1244, %v317
    %v1251 = vmul.f32 %v1247, %v317
    %v1252 = vsel %vm265, -1e+30, %v1250
    %v1253 = vsel %vm266, -1e+30, %v1251
    %v1254 = vsel %vm269, %v1252, -inf
    %1255 = vmax.xlane.f32.xlu0 %v1254
    %v1256 = vpop.xlane.xlu0 %1255
    %v1257 = vsel %vm269, %v1253, -inf
    %1258 = vmax.xlane.f32.xlu0 %v1257
    %v1259 = vpop.xlane.xlu0 %1258
    %v1260 = vsub.f32 %v1252, %v1256
    %v1261 = vsub.f32 %v1253, %v1259
    %v1262 = vmul.f32 %v1260, 1.442695
    %v1263 = vpow.pop %v1262
    %v1264 = vmul.f32 %v1261, 1.442695
    %v1265 = vpow.pop %v1264
    %v1266 = vsel %vm269, %v1263, 0.0
    %1267 = vadd.xlane.f32.xlu0 %v1266
    %v1268 = vpop.xlane.xlu0 %1267
    %v1269 = vsel %vm269, %v1265, 0.0
    %1270 = vadd.xlane.f32.xlu0 %v1269
    %v1271 = vpop.xlane.xlu0 %1270
    %v1272 = vrcp.pop %v1268
    %v1273 = vrcp.pop %v1271
    %v1274 = vmul.f32 %v1263, %v1272
    %v1275 = vmul.f32 %v1265, %v1273
    %v1276 = vpack.c.bf16 %v1275, %v1274
    %1277 = vrot.lane.b32.xlu0 %v879, 80
    %v1278 = vpop.permute.xlu0 %1277
    %v1281 = vsel %vm269, %v1276, 0
    %1283 = vmatprep.subr.bf16.mxu0 0
    %1284 = vmatpush1.bf16.msra.mxu0 0
    %1285 = vmatprep.subr.bf16.mxu0 0
    %1286 = vmatpush1.bf16.msra.mxu0 0
    %1287 = vmatprep.subr.bf16.mxu0 0
    %1288 = vmatpush1.bf16.msra.mxu0 0
    %1289 = vmatprep.subr.bf16.mxu0 0
    %1290 = vmatpush1.bf16.msra.mxu0 0
    %1291 = vmatprep.subr.bf16.mxu0 0
    %1292 = vmatpush1.bf16.msra.mxu0 0
    %1293 = vmatprep.subr.bf16.mxu0 0
    %1294 = vmatpush1.bf16.msra.mxu0 0
    %1295 = vmatprep.subr.bf16.mxu0 0
    %1296 = vmatpush1.bf16.msra.mxu0 0
    %1297 = vmatprep.subr.bf16.mxu0 0
    %1298 = vmatpush1.bf16.msra.mxu0 %v1278
    %1299 = vmatprep.subr.bf16.mxu0 0
    %1300 = vmatpush2.bf16.msra.mxu0 0
    %1301 = vmatprep.subr.bf16.mxu0 0
    %1302 = vmatpush2.bf16.msra.mxu0 0
    %1303 = vmatprep.subr.bf16.mxu0 0
    %1304 = vmatpush2.bf16.msra.mxu0 0
    %1305 = vmatprep.subr.bf16.mxu0 0
    %1306 = vmatpush2.bf16.msra.mxu0 0
    %1307 = vmatprep.subr.bf16.mxu0 0
    %1308 = vmatpush2.bf16.msra.mxu0 0
    %1309 = vmatprep.subr.bf16.mxu0 0
    %1310 = vmatpush2.bf16.msra.mxu0 0
    %1311 = vmatprep.subr.bf16.mxu0 0
    %1312 = vmatpush2.bf16.msra.mxu0 0
    %1313 = vmatprep.subr.bf16.mxu0 0
    %1314 = vmatpush2.bf16.msra.mxu0 0
    %1315 = vmatprep.mubr.bf16.mxu0 0
    %1316 = vmatmul.mubr.bf16.gmra.mxu0 %v1281
    %v1317 = vpop.f32.mrf.mxu0
    %v1318 = vadd.f32 0.0, %v1317
    %v1319 = vpop.f32.mrf.mxu0
    %v1320 = vpop.f32.mrf.mxu0
    %v1321 = vadd.f32 0.0, %v1320
    %v1322 = vpop.f32.mrf.mxu0
    %1323 = vdwg.mxu0
    %1326 = vrot.lane.b32.xlu0 %v1318, 48
    %v1327 = vpop.permute.xlu0 %1326
    %1328 = vrot.lane.b32.xlu0 %v1321, 48
    %v1329 = vpop.permute.xlu0 %1328
    %1332 = vst.msk [vmem:[#allocation2 + $0x10] sm:$0xff] %vm800, %v1327
    %1333 = vst.msk [vmem:[#allocation2 + $0x18] sm:$0xff] %vm800, %v1329
    %v1334 = vld [vmem:[#allocation2] sm:$0xff]
    %v1335 = vld [vmem:[#allocation2 + $0x8] sm:$0xff]
    %v1336 = vld [vmem:[#allocation2 + $0x10] sm:$0xff]
    %v1337 = vld [vmem:[#allocation2 + $0x18] sm:$0xff]
    %v1338 = vpack.c.bf16 %v1335, %v1334
    %v1339 = vpack.c.bf16 %v1337, %v1336
    %v1340 = vld [vmem:[%s5] sm:$0xf]
    %v1341 = vld [vmem:[%s5 + $0x4] sm:$0xf]
    %v1342 = vld [vmem:[%s5 + $0x8] sm:$0xf]
    %v1343 = vld [vmem:[%s5 + $0xc] sm:$0xf]
    %v1344 = vld [vmem:[%s5 + $0x10] sm:$0xf]
    %v1345 = vld [vmem:[%s5 + $0x14] sm:$0xf]
    %v1346 = vld [vmem:[%s5 + $0x18] sm:$0xf]
    %v1347 = vld [vmem:[%s5 + $0x1c] sm:$0xf]
    %v1348 = vld [vmem:[%s6] sm:$0x1]
    %v1350 = vlaneseq
    %v1351 = vshrl.u32 %v1350, 7
    %v1352 = vsub.s32 0, %v1351
    %v1353 = vrot.slane %v1348, %v1352
    %v1363 = vunpack.c.l.b16 %v1340
    %v1364 = vunpack.c.l.b16 %v1341
    %v1365 = vunpack.c.l.b16 %v1342
    %v1366 = vunpack.c.l.b16 %v1343
    %v1367 = vunpack.c.l.b16 %v1344
    %v1368 = vunpack.c.l.b16 %v1345
    %v1369 = vunpack.c.l.b16 %v1346
    %v1370 = vunpack.c.l.b16 %v1347
    %v1371 = vpack.c.b16 %v1364, %v1363
    %v1372 = vpack.c.b16 %v1366, %v1365
    %v1373 = vpack.c.b16 %v1368, %v1367
    %v1374 = vpack.c.b16 %v1370, %v1369
    %vm1379 = vcmask 523264
    %v1381 = vsel %vm1379, %v1338, 0
    %v1384 = vsel %vm1379, %v1339, 0
    %1386 = vmatprep.subr.bf16.mxu0 0
    %1387 = vmatpush1.bf16.msra.mxu0 0
    %1388 = vmatprep.subr.bf16.mxu0 0
    %1389 = vmatpush1.bf16.msra.mxu0 0
    %1390 = vmatprep.subr.bf16.mxu0 0
    %1391 = vmatpush1.bf16.msra.mxu0 0
    %1392 = vmatprep.subr.bf16.mxu0 0
    %1393 = vmatpush1.bf16.msra.mxu0 0
    %1394 = vmatprep.subr.bf16.mxu0 0
    %1395 = vmatpush1.bf16.msra.mxu0 %v1374
    %1396 = vmatprep.subr.bf16.mxu0 0
    %1397 = vmatpush1.bf16.msra.mxu0 %v1373
    %1398 = vmatprep.subr.bf16.mxu0 0
    %1399 = vmatpush1.bf16.msra.mxu0 %v1372
    %1400 = vmatprep.subr.bf16.mxu0 0
    %1401 = vmatpush1.bf16.msra.mxu0 %v1371
    %1402 = vmatprep.subr.bf16.mxu0 0
    %1403 = vmatpush2.bf16.msra.mxu0 0
    %1404 = vmatprep.subr.bf16.mxu0 0
    %1405 = vmatpush2.bf16.msra.mxu0 0
    %1406 = vmatprep.subr.bf16.mxu0 0
    %1407 = vmatpush2.bf16.msra.mxu0 0
    %1408 = vmatprep.subr.bf16.mxu0 0
    %1409 = vmatpush2.bf16.msra.mxu0 0
    %1410 = vmatprep.subr.bf16.mxu0 0
    %1411 = vmatpush2.bf16.msra.mxu0 0
    %1412 = vmatprep.subr.bf16.mxu0 0
    %1413 = vmatpush2.bf16.msra.mxu0 0
    %1414 = vmatprep.subr.bf16.mxu0 0
    %1415 = vmatpush2.bf16.msra.mxu0 0
    %1416 = vmatprep.subr.bf16.mxu0 0
    %1417 = vmatpush2.bf16.msra.mxu0 0
    %1418 = vmatprep.mubr.bf16.mxu0 0
    %1419 = vmatmul.mubr.bf16.gmra.mxu0 %v1381
    %v1420 = vpop.f32.mrf.mxu0
    %v1421 = vadd.f32 %v1353, %v1420
    %v1422 = vpop.f32.mrf.mxu0
    %v1423 = vpop.f32.mrf.mxu0
    %v1424 = vadd.f32 %v1353, %v1423
    %v1425 = vpop.f32.mrf.mxu0
    %1426 = vmatprep.mubr.bf16.mxu0 0
    %1427 = vmatmul.mubr.bf16.gmra.mxu0 %v1384
    %v1428 = vpop.f32.mrf.mxu0
    %v1429 = vadd.f32 %v1353, %v1428
    %v1430 = vpop.f32.mrf.mxu0
    %v1431 = vpop.f32.mrf.mxu0
    %v1432 = vadd.f32 %v1353, %v1431
    %v1433 = vpop.f32.mrf.mxu0
    %1434 = vdwg.mxu0
    %1435 = vst.msk [vmem:[#allocation7] sm:$0xff] %vm74, %v1421
    %1436 = vst.msk [vmem:[#allocation7 + $0x8] sm:$0xff] %vm74, %v1424
    %1437 = vst.msk [vmem:[#allocation7 + $0x10] sm:$0xff] %vm74, %v1429
    %1438 = vst.msk [vmem:[#allocation7 + $0x18] sm:$0xff] %vm74, %v1432
    // Predicated region
    $region34: #{tpu_custom_call.1} parent=1 // pred_check
      _
    $region35: #{tpu_custom_call.1} parent=1 // pred_check_branch
      %1440 = sbr.rel (0) target = $region37
    $region36: #{tpu_custom_call.1} parent=1 // pred_region
      %s1442 = ssub.s32 512, 512
      %1443 = vsyncadd [#allocation6], %s1442
      %s1444 = sshll.u32 [#allocation7], 4
      %s1445 = int_to_ptr.vmem [resolvable:$true] %s1444
      %1450 = dma.vmem_to_hbm [thread:$0]  %s1445, 512, %s7, [#allocation6], 128, 128, 8
    $region37: #{tpu_custom_call.1} parent=1 // pred_fallthru
      _
    // Predicated region
    $region38: #{tpu_custom_call.1} parent=1 // pred_check
      _
    $region39: #{tpu_custom_call.1} parent=1 // pred_check_branch
      %1452 = sbr.rel (0) target = $region41
    $region40: #{tpu_custom_call.1} parent=1 // pred_region
      %1453 = dma.done [#allocation6], 512
    $region41: #{tpu_custom_call.1} parent=1 // pred_fallthru
      _
    %1454 = vsyncpa [#allocation5], 1
    %1455 = vsyncpa [#allocation6], 1

</llo_original>
